<compile_context>
chip_gen: v6e
topology: v6e:2x2x1
jax: 0.10.0
libtpu: 0.0.40
codegen_flags: <defaults>
</compile_context>

<pallas_src>
import functools

import jax
import jax.numpy as jnp
import numpy as np
from jax import lax
from jax.experimental import pallas as pl
from jax.experimental.pallas import tpu as pltpu

EPS = 1e-5  # nn.BatchNorm2d default eps


def resblock_kernel(xp_ref, b1_ref, b2_ref, fold_ref, bcast_ref, mask_ref,
                    g1_ref, be1_ref, g2_ref, be2_ref, o_ref, pad_ref,
                    *, inv_m):
    # xp_ref:   (R, WC)  f32   H-padded input slab, R = N*(H+2), lane-dense WC
    # b*_ref:   (3, WC, WC) bf16  banded conv weights, one matrix per ky tap
    # fold_ref: (WC, C)  f32   lane -> channel fold (tiled identity)
    # bcast_ref:(C, WC)  f32   channel -> lane broadcast (= fold^T)
    # mask_ref: (R-2, 1) f32   1 on real pixel rows, 0 on inter-image halo rows
    # g*/be*:   (1, C)   f32   BN gamma / beta
    # o_ref:    (R, WC)  f32   padded output slab (wrapper slices halo rows)
    # pad_ref:  (R, WC)  f32   scratch: H-padded h1 for conv2
    R, WC = xp_ref.shape
    Rm2 = R - 2
    mask = mask_ref[...]                                   # (Rm2, 1)

    def conv3x3(src_ref, b_ref, center=None):
        # 3 lane-dense (Rm2, WC) x (WC, WC) bf16 MXU matmuls, one per ky tap.
        # Taps are contiguous row-slices of the padded slab (offsets 0/1/2) —
        # pure loads, no strided copies; cast to bf16 in-register.
        t0 = src_ref[0:Rm2, :].astype(jnp.bfloat16)
        t1 = (center if center is not None
              else src_ref[1:1 + Rm2, :].astype(jnp.bfloat16))
        t2 = src_ref[2:2 + Rm2, :].astype(jnp.bfloat16)
        acc = jnp.dot(t0, b_ref[0], preferred_element_type=jnp.float32)
        acc = acc + jnp.dot(t1, b_ref[1], preferred_element_type=jnp.float32)
        acc = acc + jnp.dot(t2, b_ref[2], preferred_element_type=jnp.float32)
        return acc
        # TODO(synk): on v6e/v7x the 3 ky taps could be fused into a single
        # K=3*WC matmul to fill the 256-deep MXU, but building the (Rm2, 3*WC)
        # LHS slab re-introduces the VMEM copies removed above; at K=WC=128
        # the 3-tap form also exactly matches v5e's 128x128 MXU.

    def batchnorm(h, g_ref, be_ref):
        # Training-mode BN (biased variance), halo rows masked out of the
        # stats, all accumulation in f32.  Fused: one (2,WC)x(WC,C) fold
        # matmul and one (2,C)x(C,WC) broadcast matmul per BN.
        hm = h * mask
        s12 = jnp.concatenate(
            [jnp.sum(hm, axis=0, keepdims=True),
             jnp.sum(hm * h, axis=0, keepdims=True)], axis=0)          # (2,WC)
        s12 = jnp.dot(s12, fold_ref[...],
                      preferred_element_type=jnp.float32)               # (2,C)
        mean = s12[0:1, :] * inv_m
        var = jnp.maximum(s12[1:2, :] * inv_m - mean * mean, 0.0)       # clamp
        scale = g_ref[...] * lax.rsqrt(var + EPS)
        shift = be_ref[...] - mean * scale
        ss = jnp.dot(jnp.concatenate([scale, shift], axis=0), bcast_ref[...],
                     preferred_element_type=jnp.float32)                # (2,WC)
        return h * ss[0:1, :] + ss[1:2, :]

    # conv1 -> bn1 -> relu  (conv bias dropped: cancelled by batch-mean sub)
    h1 = jnp.maximum(batchnorm(conv3x3(xp_ref, b1_ref), g1_ref, be1_ref), 0.0)

    # Re-pad h1 for conv2: one contiguous store of the masked interior rows
    # plus the two outer halo rows; inter-image halos are zeroed by the mask.
    h1m = h1 * mask
    zrow = jnp.zeros((1, WC), jnp.float32)
    pad_ref[0:1, :] = zrow
    pad_ref[R - 1:R, :] = zrow
    pad_ref[1:1 + Rm2, :] = h1m

    # conv2 -> bn2 (center tap fed directly from the live h1 value — one fewer
    # VMEM round-trip), then residual add + relu.  Output stays in the padded
    # row layout with a lane-dense WC (multiple of 128) last dim.
    h2 = batchnorm(conv3x3(pad_ref, b2_ref, center=h1m.astype(jnp.bfloat16)),
                   g2_ref, be2_ref)
    out = jnp.maximum(h2 + xp_ref[1:1 + Rm2, :], 0.0)   # residual read in f32
    o_ref[0:1, :] = zrow
    o_ref[R - 1:R, :] = zrow
    o_ref[1:1 + Rm2, :] = out


def _banded_weights(w_oihw, W):
    """(Cout, Cin, 3, 3) conv weight -> (3, W*Cin, W*Cout) block-banded mats.

    B[ky, x*Cin+ci, w*Cout+co] = weight[co, ci, ky, kx] where x == w + kx - 1,
    else 0.  Out-of-range taps at the W boundary are simply absent, which
    implements the SAME (padding=1) zero padding along W inside the matmul.
    """
    Cout, Cin, KH, KW = w_oihw.shape
    wt = jnp.transpose(w_oihw.astype(jnp.float32), (2, 3, 1, 0))  # (KH,KW,Ci,Co)
    idx = jnp.arange(W)
    sel = (idx[None, None, :] ==
           idx[None, :, None] + jnp.arange(KW)[:, None, None] - (KW // 2))
    sel = sel.astype(jnp.float32)                                 # (KW, W, W)
    b5 = jnp.einsum('awx,yaio->yxiwo', sel, wt)                   # (KH,W,Ci,W,Co)
    return b5.reshape(KH, W * Cin, W * Cout)


def resblock_pallas_nhwc(x_nhwc, params):
    """Hot-path entry point: NHWC in / NHWC out, no layout transposes."""
    # Conv biases are unused: exactly cancelled by training-mode BN mean sub.
    w1, _cb1, w2, _cb2, g1, b1, g2, b2 = params
    N, H, W, C = x_nhwc.shape
    WC = W * C
    R = N * (H + 2)
    Rm2 = R - 2

    # H-halo zero padding done once on the XLA side (HBM, cheap); the
    # W-direction padding and kx taps are folded into the banded weights.
    xp = jnp.pad(x_nhwc.astype(jnp.float32).reshape(N, H, WC),
                 ((0, 0), (1, 1), (0, 0))).reshape(R, WC)

    B1 = _banded_weights(w1, W).astype(jnp.bfloat16)
    B2 = _banded_weights(w2, W).astype(jnp.bfloat16)
    fold = jnp.tile(jnp.eye(C, dtype=jnp.float32), (W, 1))        # (WC, C)
    bcast = jnp.transpose(fold)                                    # (C, WC)

    # Valid-row mask for the (Rm2, WC) conv outputs: 0 on the 2N-2 rows that
    # straddle image boundaries, 1 on real pixels.
    pos = (jnp.arange(Rm2) + 1) % (H + 2)
    mask = ((pos >= 1) & (pos <= H)).astype(jnp.float32).reshape(Rm2, 1)

    inv_m = 1.0 / float(N * H * W)

    # VMEM budget: declared buffers + estimate of compiler-managed f32
    # intermediates (acc / h1 / h2 / masked temps).  Guard is conservative for
    # v7x (64 MiB physical, 32 MiB scoped); on v5e/v6e (128 MiB VMEM) both the
    # guard and vmem_limit_bytes can be raised to keep larger shapes on this
    # single-block fast path.
    declared = ((xp.size + 2 * R * WC) * 4                # xp, out, pad scratch
                + (B1.size + B2.size) * 2                 # bf16 banded weights
                + (fold.size + bcast.size + mask.size + 4 * C) * 4)
    intermediates = 6 * Rm2 * WC * 4
    if declared + intermediates > 20 * 1024 * 1024:
        raise ValueError(
            "ResBlock working set (%d bytes incl. intermediates) too large for "
            "the single-block VMEM kernel; needs grid tiling (see TODO)."
            % (declared + intermediates))
    # TODO(synk): for large feature maps (and to use both v7x TensorCores) add
    # a leading "parallel" grid axis over N/H row-tiles with a two-pass BN
    # (pass 1: conv + per-tile sum/sumsq partials, pass 2: normalize + conv2).

    vmem = pl.BlockSpec(memory_space=pltpu.MemorySpace.VMEM)
    kernel = functools.partial(resblock_kernel, inv_m=inv_m)
    out2d = pl.pallas_call(
        kernel,
        out_shape=jax.ShapeDtypeStruct((R, WC), jnp.float32),
        in_specs=[vmem] * 10,
        out_specs=vmem,
        scratch_shapes=[pltpu.VMEM((R, WC), jnp.float32)],
        compiler_params=pltpu.CompilerParams(vmem_limit_bytes=32 * 1024 * 1024),
    )(xp, B1, B2, fold, bcast, mask,
      g1.reshape(1, C).astype(jnp.float32), b1.reshape(1, C).astype(jnp.float32),
      g2.reshape(1, C).astype(jnp.float32), b2.reshape(1, C).astype(jnp.float32))

    # Drop the H-halo rows (garbage) and restore NHWC.
    return out2d.reshape(N, H + 2, W, C)[:, 1:H + 1, :, :]


def resblock_pallas(x_nchw, params):
    """PyTorch-layout (NCHW) wrapper.  For production keep NHWC end-to-end in
    the surrounding model and call resblock_pallas_nhwc directly: each layout
    transpose here is a full HBM round-trip outside the kernel."""
    x = jnp.transpose(x_nchw, (0, 2, 3, 1))
    y = resblock_pallas_nhwc(x, params)
    return jnp.transpose(y, (0, 3, 1, 2))


def resblock_ref(x_nchw, params):
    """Pure-JAX f32 reference mirroring the PyTorch training-mode forward."""
    w1, cb1, w2, cb2, g1, b1, g2, b2 = params
    x = jnp.transpose(x_nchw, (0, 2, 3, 1)).astype(jnp.float32)    # NHWC

    def conv(inp, w_oihw, cb):
        w = jnp.transpose(w_oihw, (2, 3, 1, 0))                    # HWIO
        y = lax.conv_general_dilated(inp, w, (1, 1), 'SAME',
                                     dimension_numbers=('NHWC', 'HWIO', 'NHWC'))
        return y + cb.reshape(1, 1, 1, -1)

    def bn(h, g, b):
        m = jnp.mean(h, axis=(0, 1, 2), keepdims=True)
        v = jnp.mean((h - m) ** 2, axis=(0, 1, 2), keepdims=True)
        return (h - m) * lax.rsqrt(v + EPS) * g.reshape(1, 1, 1, -1) \
               + b.reshape(1, 1, 1, -1)

    h = jax.nn.relu(bn(conv(x, w1, cb1), g1, b1))
    h = bn(conv(h, w2, cb2), g2, b2)
    return jnp.transpose(jax.nn.relu(h + x), (0, 3, 1, 2))


if __name__ == "__main__":
    N, C, H, W = 2, 8, 16, 16     # W*C = 128 -> fully lane-dense activations
    key = jax.random.PRNGKey(0)
    ks = jax.random.split(key, 8)

    x = jax.random.normal(ks[0], (N, C, H, W), jnp.float32)

    # nn.Conv2d(ch, ch, 3, 1, 1) weights in PyTorch (Cout, Cin, kH, kW) layout
    # and nn.BatchNorm2d(ch) affine params.
    w1 = 0.1 * jax.random.normal(ks[1], (C, C, 3, 3), jnp.float32)
    w2 = 0.1 * jax.random.normal(ks[2], (C, C, 3, 3), jnp.float32)
    cb1 = 0.1 * jax.random.normal(ks[3], (C,), jnp.float32)
    cb2 = 0.1 * jax.random.normal(ks[4], (C,), jnp.float32)
    g1 = 1.0 + 0.1 * jax.random.normal(ks[5], (C,), jnp.float32)
    g2 = 1.0 + 0.1 * jax.random.normal(ks[6], (C,), jnp.float32)
    b1 = 0.1 * jax.random.normal(ks[7], (C,), jnp.float32)
    b2 = jnp.zeros((C,), jnp.float32)

    params = (w1, cb1, w2, cb2, g1, b1, g2, b2)

    fwd = jax.jit(resblock_pallas)
    out = jax.block_until_ready(fwd(x, params))
    ref = jax.block_until_ready(resblock_ref(x, params))

    # Tolerance reflects bf16 MXU operands (f32 accumulation / f32 BN stats)
    # compared against the pure-f32 reference.
    np.testing.assert_allclose(np.asarray(out), np.asarray(ref),
                               rtol=2e-2, atol=4e-2)
    print("KERNEL_OK")
</pallas_src>

<mosaic_0001>
module attributes {stable_mosaic.version = 11 : i64} {
  func.func @resblock_kernel(%arg0: memref<36x128xf32, #tpu.memory_space<vmem>>, %arg1: memref<3x128x128xbf16, #tpu.memory_space<vmem>>, %arg2: memref<3x128x128xbf16, #tpu.memory_space<vmem>>, %arg3: memref<128x8xf32, #tpu.memory_space<vmem>>, %arg4: memref<8x128xf32, #tpu.memory_space<vmem>>, %arg5: memref<34x1xf32, #tpu.memory_space<vmem>>, %arg6: memref<1x8xf32, #tpu.memory_space<vmem>>, %arg7: memref<1x8xf32, #tpu.memory_space<vmem>>, %arg8: memref<1x8xf32, #tpu.memory_space<vmem>>, %arg9: memref<1x8xf32, #tpu.memory_space<vmem>>, %arg10: memref<36x128xf32, #tpu.memory_space<vmem>>, %arg11: memref<36x128xf32, #tpu.memory_space<vmem>>) attributes {dimension_semantics = [], scalar_prefetch = 0 : i64, scratch_operands = 1 : i64, tpu.core_type = #tpu.core_type<tc>} {
    %c0 = arith.constant 0 : index
    %c0_0 = arith.constant 0 : index
    %0 = vector.load %arg5[%c0, %c0_0] : memref<34x1xf32, #tpu.memory_space<vmem>>, vector<34x1xf32>
    %c0_1 = arith.constant 0 : index
    %c0_2 = arith.constant 0 : index
    %1 = vector.load %arg0[%c0_1, %c0_2] : memref<36x128xf32, #tpu.memory_space<vmem>>, vector<34x128xf32>
    %2 = arith.truncf %1 : vector<34x128xf32> to vector<34x128xbf16>
    %c1 = arith.constant 1 : index
    %c0_3 = arith.constant 0 : index
    %3 = vector.load %arg0[%c1, %c0_3] : memref<36x128xf32, #tpu.memory_space<vmem>>, vector<34x128xf32>
    %4 = arith.truncf %3 : vector<34x128xf32> to vector<34x128xbf16>
    %c2 = arith.constant 2 : index
    %c0_4 = arith.constant 0 : index
    %5 = vector.load %arg0[%c2, %c0_4] : memref<36x128xf32, #tpu.memory_space<vmem>>, vector<34x128xf32>
    %6 = arith.truncf %5 : vector<34x128xf32> to vector<34x128xbf16>
    %c0_5 = arith.constant 0 : index
    %c0_6 = arith.constant 0 : index
    %c0_7 = arith.constant 0 : index
    %7 = vector.load %arg1[%c0_5, %c0_6, %c0_7] : memref<3x128x128xbf16, #tpu.memory_space<vmem>>, vector<1x128x128xbf16>
    %8 = vector.shape_cast %7 : vector<1x128x128xbf16> to vector<128x128xbf16>
    %cst = arith.constant dense<0.000000e+00> : vector<34x128xf32>
    %9 = tpu.matmul %2, %8, %cst {dimension_numbers = #tpu.dot_dimension_numbers<[1], [0], [0], [1], [0, 0, 1, 1], [], []>} : vector<34x128xbf16>, vector<128x128xbf16>, vector<34x128xf32> -> vector<34x128xf32>
    %c1_8 = arith.constant 1 : index
    %c0_9 = arith.constant 0 : index
    %c0_10 = arith.constant 0 : index
    %10 = vector.load %arg1[%c1_8, %c0_9, %c0_10] : memref<3x128x128xbf16, #tpu.memory_space<vmem>>, vector<1x128x128xbf16>
    %11 = vector.shape_cast %10 : vector<1x128x128xbf16> to vector<128x128xbf16>
    %cst_11 = arith.constant dense<0.000000e+00> : vector<34x128xf32>
    %12 = tpu.matmul %4, %11, %cst_11 {dimension_numbers = #tpu.dot_dimension_numbers<[1], [0], [0], [1], [0, 0, 1, 1], [], []>} : vector<34x128xbf16>, vector<128x128xbf16>, vector<34x128xf32> -> vector<34x128xf32>
    %13 = arith.addf %9, %12 : vector<34x128xf32>
    %c2_12 = arith.constant 2 : index
    %c0_13 = arith.constant 0 : index
    %c0_14 = arith.constant 0 : index
    %14 = vector.load %arg1[%c2_12, %c0_13, %c0_14] : memref<3x128x128xbf16, #tpu.memory_space<vmem>>, vector<1x128x128xbf16>
    %15 = vector.shape_cast %14 : vector<1x128x128xbf16> to vector<128x128xbf16>
    %cst_15 = arith.constant dense<0.000000e+00> : vector<34x128xf32>
    %16 = tpu.matmul %6, %15, %cst_15 {dimension_numbers = #tpu.dot_dimension_numbers<[1], [0], [0], [1], [0, 0, 1, 1], [], []>} : vector<34x128xbf16>, vector<128x128xbf16>, vector<34x128xf32> -> vector<34x128xf32>
    %17 = arith.addf %13, %16 : vector<34x128xf32>
    %18 = vector.broadcast %0 : vector<34x1xf32> to vector<34x128xf32>
    %19 = arith.mulf %17, %18 : vector<34x128xf32>
    %cst_16 = arith.constant dense<0.000000e+00> : vector<128xf32>
    %20 = vector.multi_reduction <add>, %19, %cst_16 [0] : vector<34x128xf32> to vector<128xf32>
    %21 = vector.shape_cast %20 : vector<128xf32> to vector<1x128xf32>
    %22 = arith.mulf %19, %17 : vector<34x128xf32>
    %cst_17 = arith.constant dense<0.000000e+00> : vector<128xf32>
    %23 = vector.multi_reduction <add>, %22, %cst_17 [0] : vector<34x128xf32> to vector<128xf32>
    %24 = vector.shape_cast %23 : vector<128xf32> to vector<1x128xf32>
    %25 = tpu.concatenate %21, %24 in 0 : vector<1x128xf32>, vector<1x128xf32> -> vector<2x128xf32>
    %c0_18 = arith.constant 0 : index
    %c0_19 = arith.constant 0 : index
    %26 = vector.load %arg3[%c0_18, %c0_19] : memref<128x8xf32, #tpu.memory_space<vmem>>, vector<128x8xf32>
    %cst_20 = arith.constant dense<0.000000e+00> : vector<2x8xf32>
    %27 = tpu.matmul %25, %26, %cst_20 {dimension_numbers = #tpu.dot_dimension_numbers<[1], [0], [0], [1], [0, 0, 1, 1], [], []>} : vector<2x128xf32>, vector<128x8xf32>, vector<2x8xf32> -> vector<2x8xf32>
    %28 = vector.extract_strided_slice %27 {offsets = [0, 0], sizes = [1, 8], strides = [1, 1]} : vector<2x8xf32> to vector<1x8xf32>
    %cst_21 = arith.constant 0.001953125 : f32
    %29 = vector.broadcast %cst_21 : f32 to vector<1x8xf32>
    %30 = arith.mulf %28, %29 : vector<1x8xf32>
    %31 = vector.extract_strided_slice %27 {offsets = [1, 0], sizes = [1, 8], strides = [1, 1]} : vector<2x8xf32> to vector<1x8xf32>
    %cst_22 = arith.constant 0.001953125 : f32
    %32 = vector.broadcast %cst_22 : f32 to vector<1x8xf32>
    %33 = arith.mulf %31, %32 : vector<1x8xf32>
    %34 = arith.mulf %30, %30 : vector<1x8xf32>
    %35 = arith.subf %33, %34 : vector<1x8xf32>
    %cst_23 = arith.constant 0.000000e+00 : f32
    %36 = vector.broadcast %cst_23 : f32 to vector<1x8xf32>
    %37 = arith.maximumf %35, %36 : vector<1x8xf32>
    %c0_24 = arith.constant 0 : index
    %c0_25 = arith.constant 0 : index
    %38 = vector.load %arg6[%c0_24, %c0_25] : memref<1x8xf32, #tpu.memory_space<vmem>>, vector<1x8xf32>
    %cst_26 = arith.constant 9.99999974E-6 : f32
    %39 = vector.broadcast %cst_26 : f32 to vector<1x8xf32>
    %40 = arith.addf %37, %39 : vector<1x8xf32>
    %41 = math.rsqrt %40 : vector<1x8xf32>
    %42 = arith.mulf %38, %41 : vector<1x8xf32>
    %c0_27 = arith.constant 0 : index
    %c0_28 = arith.constant 0 : index
    %43 = vector.load %arg7[%c0_27, %c0_28] : memref<1x8xf32, #tpu.memory_space<vmem>>, vector<1x8xf32>
    %44 = arith.mulf %30, %42 : vector<1x8xf32>
    %45 = arith.subf %43, %44 : vector<1x8xf32>
    %46 = tpu.concatenate %42, %45 in 0 : vector<1x8xf32>, vector<1x8xf32> -> vector<2x8xf32>
    %c0_29 = arith.constant 0 : index
    %c0_30 = arith.constant 0 : index
    %47 = vector.load %arg4[%c0_29, %c0_30] : memref<8x128xf32, #tpu.memory_space<vmem>>, vector<8x128xf32>
    %cst_31 = arith.constant dense<0.000000e+00> : vector<2x128xf32>
    %48 = tpu.matmul %46, %47, %cst_31 {dimension_numbers = #tpu.dot_dimension_numbers<[1], [0], [0], [1], [0, 0, 1, 1], [], []>} : vector<2x8xf32>, vector<8x128xf32>, vector<2x128xf32> -> vector<2x128xf32>
    %49 = vector.extract_strided_slice %48 {offsets = [0, 0], sizes = [1, 128], strides = [1, 1]} : vector<2x128xf32> to vector<1x128xf32>
    %50 = vector.broadcast %49 : vector<1x128xf32> to vector<34x128xf32>
    %51 = arith.mulf %17, %50 : vector<34x128xf32>
    %52 = vector.extract_strided_slice %48 {offsets = [1, 0], sizes = [1, 128], strides = [1, 1]} : vector<2x128xf32> to vector<1x128xf32>
    %53 = vector.broadcast %52 : vector<1x128xf32> to vector<34x128xf32>
    %54 = arith.addf %51, %53 : vector<34x128xf32>
    %cst_32 = arith.constant 0.000000e+00 : f32
    %55 = vector.broadcast %cst_32 : f32 to vector<34x128xf32>
    %56 = arith.maximumf %54, %55 : vector<34x128xf32>
    %57 = vector.broadcast %0 : vector<34x1xf32> to vector<34x128xf32>
    %58 = arith.mulf %56, %57 : vector<34x128xf32>
    %cst_33 = arith.constant 0.000000e+00 : f32
    %59 = vector.broadcast %cst_33 : f32 to vector<1x128xf32>
    %c0_34 = arith.constant 0 : index
    %c0_35 = arith.constant 0 : index
    %60 = vector.load %arg11[%c0_34, %c0_35] : memref<36x128xf32, #tpu.memory_space<vmem>>, vector<1x128xf32>
    tpu.vector_store %arg11[%c0_34, %c0_35], %59 {strides = array<i32>} : memref<36x128xf32, #tpu.memory_space<vmem>>, vector<1x128xf32>,
    %c35 = arith.constant 35 : index
    %c0_36 = arith.constant 0 : index
    %61 = vector.load %arg11[%c35, %c0_36] : memref<36x128xf32, #tpu.memory_space<vmem>>, vector<1x128xf32>
    tpu.vector_store %arg11[%c35, %c0_36], %59 {strides = array<i32>} : memref<36x128xf32, #tpu.memory_space<vmem>>, vector<1x128xf32>,
    %c1_37 = arith.constant 1 : index
    %c0_38 = arith.constant 0 : index
    %62 = vector.load %arg11[%c1_37, %c0_38] : memref<36x128xf32, #tpu.memory_space<vmem>>, vector<34x128xf32>
    tpu.vector_store %arg11[%c1_37, %c0_38], %58 {strides = array<i32>} : memref<36x128xf32, #tpu.memory_space<vmem>>, vector<34x128xf32>,
    %63 = arith.truncf %58 : vector<34x128xf32> to vector<34x128xbf16>
    %c0_39 = arith.constant 0 : index
    %c0_40 = arith.constant 0 : index
    %64 = vector.load %arg11[%c0_39, %c0_40] : memref<36x128xf32, #tpu.memory_space<vmem>>, vector<34x128xf32>
    %65 = arith.truncf %64 : vector<34x128xf32> to vector<34x128xbf16>
    %c2_41 = arith.constant 2 : index
    %c0_42 = arith.constant 0 : index
    %66 = vector.load %arg11[%c2_41, %c0_42] : memref<36x128xf32, #tpu.memory_space<vmem>>, vector<34x128xf32>
    %67 = arith.truncf %66 : vector<34x128xf32> to vector<34x128xbf16>
    %c0_43 = arith.constant 0 : index
    %c0_44 = arith.constant 0 : index
    %c0_45 = arith.constant 0 : index
    %68 = vector.load %arg2[%c0_43, %c0_44, %c0_45] : memref<3x128x128xbf16, #tpu.memory_space<vmem>>, vector<1x128x128xbf16>
    %69 = vector.shape_cast %68 : vector<1x128x128xbf16> to vector<128x128xbf16>
    %cst_46 = arith.constant dense<0.000000e+00> : vector<34x128xf32>
    %70 = tpu.matmul %65, %69, %cst_46 {dimension_numbers = #tpu.dot_dimension_numbers<[1], [0], [0], [1], [0, 0, 1, 1], [], []>} : vector<34x128xbf16>, vector<128x128xbf16>, vector<34x128xf32> -> vector<34x128xf32>
    %c1_47 = arith.constant 1 : index
    %c0_48 = arith.constant 0 : index
    %c0_49 = arith.constant 0 : index
    %71 = vector.load %arg2[%c1_47, %c0_48, %c0_49] : memref<3x128x128xbf16, #tpu.memory_space<vmem>>, vector<1x128x128xbf16>
    %72 = vector.shape_cast %71 : vector<1x128x128xbf16> to vector<128x128xbf16>
    %cst_50 = arith.constant dense<0.000000e+00> : vector<34x128xf32>
    %73 = tpu.matmul %63, %72, %cst_50 {dimension_numbers = #tpu.dot_dimension_numbers<[1], [0], [0], [1], [0, 0, 1, 1], [], []>} : vector<34x128xbf16>, vector<128x128xbf16>, vector<34x128xf32> -> vector<34x128xf32>
    %74 = arith.addf %70, %73 : vector<34x128xf32>
    %c2_51 = arith.constant 2 : index
    %c0_52 = arith.constant 0 : index
    %c0_53 = arith.constant 0 : index
    %75 = vector.load %arg2[%c2_51, %c0_52, %c0_53] : memref<3x128x128xbf16, #tpu.memory_space<vmem>>, vector<1x128x128xbf16>
    %76 = vector.shape_cast %75 : vector<1x128x128xbf16> to vector<128x128xbf16>
    %cst_54 = arith.constant dense<0.000000e+00> : vector<34x128xf32>
    %77 = tpu.matmul %67, %76, %cst_54 {dimension_numbers = #tpu.dot_dimension_numbers<[1], [0], [0], [1], [0, 0, 1, 1], [], []>} : vector<34x128xbf16>, vector<128x128xbf16>, vector<34x128xf32> -> vector<34x128xf32>
    %78 = arith.addf %74, %77 : vector<34x128xf32>
    %79 = vector.broadcast %0 : vector<34x1xf32> to vector<34x128xf32>
    %80 = arith.mulf %78, %79 : vector<34x128xf32>
    %cst_55 = arith.constant dense<0.000000e+00> : vector<128xf32>
    %81 = vector.multi_reduction <add>, %80, %cst_55 [0] : vector<34x128xf32> to vector<128xf32>
    %82 = vector.shape_cast %81 : vector<128xf32> to vector<1x128xf32>
    %83 = arith.mulf %80, %78 : vector<34x128xf32>
    %cst_56 = arith.constant dense<0.000000e+00> : vector<128xf32>
    %84 = vector.multi_reduction <add>, %83, %cst_56 [0] : vector<34x128xf32> to vector<128xf32>
    %85 = vector.shape_cast %84 : vector<128xf32> to vector<1x128xf32>
    %86 = tpu.concatenate %82, %85 in 0 : vector<1x128xf32>, vector<1x128xf32> -> vector<2x128xf32>
    %c0_57 = arith.constant 0 : index
    %c0_58 = arith.constant 0 : index
    %87 = vector.load %arg3[%c0_57, %c0_58] : memref<128x8xf32, #tpu.memory_space<vmem>>, vector<128x8xf32>
    %cst_59 = arith.constant dense<0.000000e+00> : vector<2x8xf32>
    %88 = tpu.matmul %86, %87, %cst_59 {dimension_numbers = #tpu.dot_dimension_numbers<[1], [0], [0], [1], [0, 0, 1, 1], [], []>} : vector<2x128xf32>, vector<128x8xf32>, vector<2x8xf32> -> vector<2x8xf32>
    %89 = vector.extract_strided_slice %88 {offsets = [0, 0], sizes = [1, 8], strides = [1, 1]} : vector<2x8xf32> to vector<1x8xf32>
    %cst_60 = arith.constant 0.001953125 : f32
    %90 = vector.broadcast %cst_60 : f32 to vector<1x8xf32>
    %91 = arith.mulf %89, %90 : vector<1x8xf32>
    %92 = vector.extract_strided_slice %88 {offsets = [1, 0], sizes = [1, 8], strides = [1, 1]} : vector<2x8xf32> to vector<1x8xf32>
    %cst_61 = arith.constant 0.001953125 : f32
    %93 = vector.broadcast %cst_61 : f32 to vector<1x8xf32>
    %94 = arith.mulf %92, %93 : vector<1x8xf32>
    %95 = arith.mulf %91, %91 : vector<1x8xf32>
    %96 = arith.subf %94, %95 : vector<1x8xf32>
    %cst_62 = arith.constant 0.000000e+00 : f32
    %97 = vector.broadcast %cst_62 : f32 to vector<1x8xf32>
    %98 = arith.maximumf %96, %97 : vector<1x8xf32>
    %c0_63 = arith.constant 0 : index
    %c0_64 = arith.constant 0 : index
    %99 = vector.load %arg8[%c0_63, %c0_64] : memref<1x8xf32, #tpu.memory_space<vmem>>, vector<1x8xf32>
    %cst_65 = arith.constant 9.99999974E-6 : f32
    %100 = vector.broadcast %cst_65 : f32 to vector<1x8xf32>
    %101 = arith.addf %98, %100 : vector<1x8xf32>
    %102 = math.rsqrt %101 : vector<1x8xf32>
    %103 = arith.mulf %99, %102 : vector<1x8xf32>
    %c0_66 = arith.constant 0 : index
    %c0_67 = arith.constant 0 : index
    %104 = vector.load %arg9[%c0_66, %c0_67] : memref<1x8xf32, #tpu.memory_space<vmem>>, vector<1x8xf32>
    %105 = arith.mulf %91, %103 : vector<1x8xf32>
    %106 = arith.subf %104, %105 : vector<1x8xf32>
    %107 = tpu.concatenate %103, %106 in 0 : vector<1x8xf32>, vector<1x8xf32> -> vector<2x8xf32>
    %c0_68 = arith.constant 0 : index
    %c0_69 = arith.constant 0 : index
    %108 = vector.load %arg4[%c0_68, %c0_69] : memref<8x128xf32, #tpu.memory_space<vmem>>, vector<8x128xf32>
    %cst_70 = arith.constant dense<0.000000e+00> : vector<2x128xf32>
    %109 = tpu.matmul %107, %108, %cst_70 {dimension_numbers = #tpu.dot_dimension_numbers<[1], [0], [0], [1], [0, 0, 1, 1], [], []>} : vector<2x8xf32>, vector<8x128xf32>, vector<2x128xf32> -> vector<2x128xf32>
    %110 = vector.extract_strided_slice %109 {offsets = [0, 0], sizes = [1, 128], strides = [1, 1]} : vector<2x128xf32> to vector<1x128xf32>
    %111 = vector.broadcast %110 : vector<1x128xf32> to vector<34x128xf32>
    %112 = arith.mulf %78, %111 : vector<34x128xf32>
    %113 = vector.extract_strided_slice %109 {offsets = [1, 0], sizes = [1, 128], strides = [1, 1]} : vector<2x128xf32> to vector<1x128xf32>
    %114 = vector.broadcast %113 : vector<1x128xf32> to vector<34x128xf32>
    %115 = arith.addf %112, %114 : vector<34x128xf32>
    %c1_71 = arith.constant 1 : index
    %c0_72 = arith.constant 0 : index
    %116 = vector.load %arg0[%c1_71, %c0_72] : memref<36x128xf32, #tpu.memory_space<vmem>>, vector<34x128xf32>
    %117 = arith.addf %115, %116 : vector<34x128xf32>
    %cst_73 = arith.constant 0.000000e+00 : f32
    %118 = vector.broadcast %cst_73 : f32 to vector<34x128xf32>
    %119 = arith.maximumf %117, %118 : vector<34x128xf32>
    %c0_74 = arith.constant 0 : index
    %c0_75 = arith.constant 0 : index
    %120 = vector.load %arg10[%c0_74, %c0_75] : memref<36x128xf32, #tpu.memory_space<vmem>>, vector<1x128xf32>
    tpu.vector_store %arg10[%c0_74, %c0_75], %59 {strides = array<i32>} : memref<36x128xf32, #tpu.memory_space<vmem>>, vector<1x128xf32>,
    %c35_76 = arith.constant 35 : index
    %c0_77 = arith.constant 0 : index
    %121 = vector.load %arg10[%c35_76, %c0_77] : memref<36x128xf32, #tpu.memory_space<vmem>>, vector<1x128xf32>
    tpu.vector_store %arg10[%c35_76, %c0_77], %59 {strides = array<i32>} : memref<36x128xf32, #tpu.memory_space<vmem>>, vector<1x128xf32>,
    %c1_78 = arith.constant 1 : index
    %c0_79 = arith.constant 0 : index
    %122 = vector.load %arg10[%c1_78, %c0_79] : memref<36x128xf32, #tpu.memory_space<vmem>>, vector<34x128xf32>
    tpu.vector_store %arg10[%c1_78, %c0_79], %119 {strides = array<i32>} : memref<36x128xf32, #tpu.memory_space<vmem>>, vector<34x128xf32>,
    return
  }
}

</mosaic_0001>

<llo_original>
// kernel: tile.9
$region0: #{tile.9}
  %s0 = inlined_call_operand.vmem [shape: f32[16,8,8], index: 0, kind: input, shape index: {}]
  %s1 = inlined_call_operand.vmem [shape: f32[128,8], index: 1, kind: output, shape index: {}]
  %s2 = smov 3
  %v3 = vld [vmem:[%s0] ss:$16 sm:%s2]
  %s4 = smov 12
  %v5 = vld [vmem:[%s0] ss:$16 sm:%s4]
  %vm6 = vcmask 1043458
  %v7 = vsel %vm6, %v5, %v3
  %s8 = smov 48
  %v9 = vld [vmem:[%s0] ss:$16 sm:%s8]
  %vm10 = vcmask 1045508
  %v11 = vsel %vm10, %v9, %v7
  %s12 = smov 192
  %v13 = vld [vmem:[%s0] ss:$16 sm:%s12]
  %vm14 = vcmask 1047558
  %v15 = vsel %vm14, %v13, %v11
  %vm16 = vcmask 64512
  %17 = vst.msk [vmem:[%s1] sm:$0xff] %vm16, %v15
  %s18 = scalar_lea.vmem %s0, 15
  %s19 = smov 3
  %v20 = vld [vmem:[%s18] ss:$16 sm:%s19]
  %s21 = scalar_lea.vmem %s0, 15
  %s22 = smov 12
  %v23 = vld [vmem:[%s21] ss:$16 sm:%s22]
  %vm24 = vcmask 1043458
  %v25 = vsel %vm24, %v23, %v20
  %s26 = scalar_lea.vmem %s0, 15
  %s27 = smov 48
  %v28 = vld [vmem:[%s26] ss:$16 sm:%s27]
  %vm29 = vcmask 1045508
  %v30 = vsel %vm29, %v28, %v25
  %s31 = scalar_lea.vmem %s0, 15
  %s32 = smov 192
  %v33 = vld [vmem:[%s31] ss:$16 sm:%s32]
  %vm34 = vcmask 1047558
  %v35 = vsel %vm34, %v33, %v30
  %36 = vrot.lane.b32.xlu0 %v35, 120
  %v37 = vpop.permute.xlu0 %36
  %vm38 = vcmask 1048512
  %39 = vst.msk [vmem:[%s1] sm:$0xff] %vm38, %v37
  %s40 = scalar_lea.vmem %s0, 14
  %s41 = smov 3
  %v42 = vld [vmem:[%s40] ss:$16 sm:%s41]
  %s43 = scalar_lea.vmem %s0, 14
  %s44 = smov 12
  %v45 = vld [vmem:[%s43] ss:$16 sm:%s44]
  %vm46 = vcmask 1043458
  %v47 = vsel %vm46, %v45, %v42
  %s48 = scalar_lea.vmem %s0, 14
  %s49 = smov 48
  %v50 = vld [vmem:[%s48] ss:$16 sm:%s49]
  %vm51 = vcmask 1045508
  %v52 = vsel %vm51, %v50, %v47
  %s53 = scalar_lea.vmem %s0, 14
  %s54 = smov 192
  %v55 = vld [vmem:[%s53] ss:$16 sm:%s54]
  %vm56 = vcmask 1047558
  %v57 = vsel %vm56, %v55, %v52
  %58 = vrot.lane.b32.xlu0 %v57, 112
  %v59 = vpop.permute.xlu0 %58
  %vm60 = vcmask 982912
  %61 = vst.msk [vmem:[%s1] sm:$0xff] %vm60, %v59
  %s62 = scalar_lea.vmem %s0, 13
  %s63 = smov 3
  %v64 = vld [vmem:[%s62] ss:$16 sm:%s63]
  %s65 = scalar_lea.vmem %s0, 13
  %s66 = smov 12
  %v67 = vld [vmem:[%s65] ss:$16 sm:%s66]
  %vm68 = vcmask 1043458
  %v69 = vsel %vm68, %v67, %v64
  %s70 = scalar_lea.vmem %s0, 13
  %s71 = smov 48
  %v72 = vld [vmem:[%s70] ss:$16 sm:%s71]
  %vm73 = vcmask 1045508
  %v74 = vsel %vm73, %v72, %v69
  %s75 = scalar_lea.vmem %s0, 13
  %s76 = smov 192
  %v77 = vld [vmem:[%s75] ss:$16 sm:%s76]
  %vm78 = vcmask 1047558
  %v79 = vsel %vm78, %v77, %v74
  %80 = vrot.lane.b32.xlu0 %v79, 104
  %v81 = vpop.permute.xlu0 %80
  %vm82 = vcmask 917312
  %83 = vst.msk [vmem:[%s1] sm:$0xff] %vm82, %v81
  %s84 = scalar_lea.vmem %s0, 12
  %s85 = smov 3
  %v86 = vld [vmem:[%s84] ss:$16 sm:%s85]
  %s87 = scalar_lea.vmem %s0, 12
  %s88 = smov 12
  %v89 = vld [vmem:[%s87] ss:$16 sm:%s88]
  %vm90 = vcmask 1043458
  %v91 = vsel %vm90, %v89, %v86
  %s92 = scalar_lea.vmem %s0, 12
  %s93 = smov 48
  %v94 = vld [vmem:[%s92] ss:$16 sm:%s93]
  %vm95 = vcmask 1045508
  %v96 = vsel %vm95, %v94, %v91
  %s97 = scalar_lea.vmem %s0, 12
  %s98 = smov 192
  %v99 = vld [vmem:[%s97] ss:$16 sm:%s98]
  %vm100 = vcmask 1047558
  %v101 = vsel %vm100, %v99, %v96
  %102 = vrot.lane.b32.xlu0 %v101, 96
  %v103 = vpop.permute.xlu0 %102
  %vm104 = vcmask 851712
  %105 = vst.msk [vmem:[%s1] sm:$0xff] %vm104, %v103
  %s106 = scalar_lea.vmem %s0, 11
  %s107 = smov 3
  %v108 = vld [vmem:[%s106] ss:$16 sm:%s107]
  %s109 = scalar_lea.vmem %s0, 11
  %s110 = smov 12
  %v111 = vld [vmem:[%s109] ss:$16 sm:%s110]
  %vm112 = vcmask 1043458
  %v113 = vsel %vm112, %v111, %v108
  %s114 = scalar_lea.vmem %s0, 11
  %s115 = smov 48
  %v116 = vld [vmem:[%s114] ss:$16 sm:%s115]
  %vm117 = vcmask 1045508
  %v118 = vsel %vm117, %v116, %v113
  %s119 = scalar_lea.vmem %s0, 11
  %s120 = smov 192
  %v121 = vld [vmem:[%s119] ss:$16 sm:%s120]
  %vm122 = vcmask 1047558
  %v123 = vsel %vm122, %v121, %v118
  %124 = vrot.lane.b32.xlu0 %v123, 88
  %v125 = vpop.permute.xlu0 %124
  %vm126 = vcmask 786112
  %127 = vst.msk [vmem:[%s1] sm:$0xff] %vm126, %v125
  %s128 = scalar_lea.vmem %s0, 10
  %s129 = smov 3
  %v130 = vld [vmem:[%s128] ss:$16 sm:%s129]
  %s131 = scalar_lea.vmem %s0, 10
  %s132 = smov 12
  %v133 = vld [vmem:[%s131] ss:$16 sm:%s132]
  %vm134 = vcmask 1043458
  %v135 = vsel %vm134, %v133, %v130
  %s136 = scalar_lea.vmem %s0, 10
  %s137 = smov 48
  %v138 = vld [vmem:[%s136] ss:$16 sm:%s137]
  %vm139 = vcmask 1045508
  %v140 = vsel %vm139, %v138, %v135
  %s141 = scalar_lea.vmem %s0, 10
  %s142 = smov 192
  %v143 = vld [vmem:[%s141] ss:$16 sm:%s142]
  %vm144 = vcmask 1047558
  %v145 = vsel %vm144, %v143, %v140
  %146 = vrot.lane.b32.xlu0 %v145, 80
  %v147 = vpop.permute.xlu0 %146
  %vm148 = vcmask 720512
  %149 = vst.msk [vmem:[%s1] sm:$0xff] %vm148, %v147
  %s150 = scalar_lea.vmem %s0, 9
  %s151 = smov 3
  %v152 = vld [vmem:[%s150] ss:$16 sm:%s151]
  %s153 = scalar_lea.vmem %s0, 9
  %s154 = smov 12
  %v155 = vld [vmem:[%s153] ss:$16 sm:%s154]
  %vm156 = vcmask 1043458
  %v157 = vsel %vm156, %v155, %v152
  %s158 = scalar_lea.vmem %s0, 9
  %s159 = smov 48
  %v160 = vld [vmem:[%s158] ss:$16 sm:%s159]
  %vm161 = vcmask 1045508
  %v162 = vsel %vm161, %v160, %v157
  %s163 = scalar_lea.vmem %s0, 9
  %s164 = smov 192
  %v165 = vld [vmem:[%s163] ss:$16 sm:%s164]
  %vm166 = vcmask 1047558
  %v167 = vsel %vm166, %v165, %v162
  %168 = vrot.lane.b32.xlu0 %v167, 72
  %v169 = vpop.permute.xlu0 %168
  %vm170 = vcmask 654912
  %171 = vst.msk [vmem:[%s1] sm:$0xff] %vm170, %v169
  %s172 = scalar_lea.vmem %s0, 8
  %s173 = smov 3
  %v174 = vld [vmem:[%s172] ss:$16 sm:%s173]
  %s175 = scalar_lea.vmem %s0, 8
  %s176 = smov 12
  %v177 = vld [vmem:[%s175] ss:$16 sm:%s176]
  %vm178 = vcmask 1043458
  %v179 = vsel %vm178, %v177, %v174
  %s180 = scalar_lea.vmem %s0, 8
  %s181 = smov 48
  %v182 = vld [vmem:[%s180] ss:$16 sm:%s181]
  %vm183 = vcmask 1045508
  %v184 = vsel %vm183, %v182, %v179
  %s185 = scalar_lea.vmem %s0, 8
  %s186 = smov 192
  %v187 = vld [vmem:[%s185] ss:$16 sm:%s186]
  %vm188 = vcmask 1047558
  %v189 = vsel %vm188, %v187, %v184
  %190 = vrot.lane.b32.xlu0 %v189, 64
  %v191 = vpop.permute.xlu0 %190
  %vm192 = vcmask 589312
  %193 = vst.msk [vmem:[%s1] sm:$0xff] %vm192, %v191
  %s194 = scalar_lea.vmem %s0, 7
  %s195 = smov 3
  %v196 = vld [vmem:[%s194] ss:$16 sm:%s195]
  %s197 = scalar_lea.vmem %s0, 7
  %s198 = smov 12
  %v199 = vld [vmem:[%s197] ss:$16 sm:%s198]
  %vm200 = vcmask 1043458
  %v201 = vsel %vm200, %v199, %v196
  %s202 = scalar_lea.vmem %s0, 7
  %s203 = smov 48
  %v204 = vld [vmem:[%s202] ss:$16 sm:%s203]
  %vm205 = vcmask 1045508
  %v206 = vsel %vm205, %v204, %v201
  %s207 = scalar_lea.vmem %s0, 7
  %s208 = smov 192
  %v209 = vld [vmem:[%s207] ss:$16 sm:%s208]
  %vm210 = vcmask 1047558
  %v211 = vsel %vm210, %v209, %v206
  %212 = vrot.lane.b32.xlu0 %v211, 56
  %v213 = vpop.permute.xlu0 %212
  %vm214 = vcmask 523712
  %215 = vst.msk [vmem:[%s1] sm:$0xff] %vm214, %v213
  %s216 = scalar_lea.vmem %s0, 6
  %s217 = smov 3
  %v218 = vld [vmem:[%s216] ss:$16 sm:%s217]
  %s219 = scalar_lea.vmem %s0, 6
  %s220 = smov 12
  %v221 = vld [vmem:[%s219] ss:$16 sm:%s220]
  %vm222 = vcmask 1043458
  %v223 = vsel %vm222, %v221, %v218
  %s224 = scalar_lea.vmem %s0, 6
  %s225 = smov 48
  %v226 = vld [vmem:[%s224] ss:$16 sm:%s225]
  %vm227 = vcmask 1045508
  %v228 = vsel %vm227, %v226, %v223
  %s229 = scalar_lea.vmem %s0, 6
  %s230 = smov 192
  %v231 = vld [vmem:[%s229] ss:$16 sm:%s230]
  %vm232 = vcmask 1047558
  %v233 = vsel %vm232, %v231, %v228
  %234 = vrot.lane.b32.xlu0 %v233, 48
  %v235 = vpop.permute.xlu0 %234
  %vm236 = vcmask 458112
  %237 = vst.msk [vmem:[%s1] sm:$0xff] %vm236, %v235
  %s238 = scalar_lea.vmem %s0, 5
  %s239 = smov 3
  %v240 = vld [vmem:[%s238] ss:$16 sm:%s239]
  %s241 = scalar_lea.vmem %s0, 5
  %s242 = smov 12
  %v243 = vld [vmem:[%s241] ss:$16 sm:%s242]
  %vm244 = vcmask 1043458
  %v245 = vsel %vm244, %v243, %v240
  %s246 = scalar_lea.vmem %s0, 5
  %s247 = smov 48
  %v248 = vld [vmem:[%s246] ss:$16 sm:%s247]
  %vm249 = vcmask 1045508
  %v250 = vsel %vm249, %v248, %v245
  %s251 = scalar_lea.vmem %s0, 5
  %s252 = smov 192
  %v253 = vld [vmem:[%s251] ss:$16 sm:%s252]
  %vm254 = vcmask 1047558
  %v255 = vsel %vm254, %v253, %v250
  %256 = vrot.lane.b32.xlu0 %v255, 40
  %v257 = vpop.permute.xlu0 %256
  %vm258 = vcmask 392512
  %259 = vst.msk [vmem:[%s1] sm:$0xff] %vm258, %v257
  %s260 = scalar_lea.vmem %s0, 4
  %s261 = smov 3
  %v262 = vld [vmem:[%s260] ss:$16 sm:%s261]
  %s263 = scalar_lea.vmem %s0, 4
  %s264 = smov 12
  %v265 = vld [vmem:[%s263] ss:$16 sm:%s264]
  %vm266 = vcmask 1043458
  %v267 = vsel %vm266, %v265, %v262
  %s268 = scalar_lea.vmem %s0, 4
  %s269 = smov 48
  %v270 = vld [vmem:[%s268] ss:$16 sm:%s269]
  %vm271 = vcmask 1045508
  %v272 = vsel %vm271, %v270, %v267
  %s273 = scalar_lea.vmem %s0, 4
  %s274 = smov 192
  %v275 = vld [vmem:[%s273] ss:$16 sm:%s274]
  %vm276 = vcmask 1047558
  %v277 = vsel %vm276, %v275, %v272
  %278 = vrot.lane.b32.xlu0 %v277, 32
  %v279 = vpop.permute.xlu0 %278
  %vm280 = vcmask 326912
  %281 = vst.msk [vmem:[%s1] sm:$0xff] %vm280, %v279
  %s282 = scalar_lea.vmem %s0, 3
  %s283 = smov 3
  %v284 = vld [vmem:[%s282] ss:$16 sm:%s283]
  %s285 = scalar_lea.vmem %s0, 3
  %s286 = smov 12
  %v287 = vld [vmem:[%s285] ss:$16 sm:%s286]
  %vm288 = vcmask 1043458
  %v289 = vsel %vm288, %v287, %v284
  %s290 = scalar_lea.vmem %s0, 3
  %s291 = smov 48
  %v292 = vld [vmem:[%s290] ss:$16 sm:%s291]
  %vm293 = vcmask 1045508
  %v294 = vsel %vm293, %v292, %v289
  %s295 = scalar_lea.vmem %s0, 3
  %s296 = smov 192
  %v297 = vld [vmem:[%s295] ss:$16 sm:%s296]
  %vm298 = vcmask 1047558
  %v299 = vsel %vm298, %v297, %v294
  %300 = vrot.lane.b32.xlu0 %v299, 24
  %v301 = vpop.permute.xlu0 %300
  %vm302 = vcmask 261312
  %303 = vst.msk [vmem:[%s1] sm:$0xff] %vm302, %v301
  %s304 = scalar_lea.vmem %s0, 2
  %s305 = smov 3
  %v306 = vld [vmem:[%s304] ss:$16 sm:%s305]
  %s307 = scalar_lea.vmem %s0, 2
  %s308 = smov 12
  %v309 = vld [vmem:[%s307] ss:$16 sm:%s308]
  %vm310 = vcmask 1043458
  %v311 = vsel %vm310, %v309, %v306
  %s312 = scalar_lea.vmem %s0, 2
  %s313 = smov 48
  %v314 = vld [vmem:[%s312] ss:$16 sm:%s313]
  %vm315 = vcmask 1045508
  %v316 = vsel %vm315, %v314, %v311
  %s317 = scalar_lea.vmem %s0, 2
  %s318 = smov 192
  %v319 = vld [vmem:[%s317] ss:$16 sm:%s318]
  %vm320 = vcmask 1047558
  %v321 = vsel %vm320, %v319, %v316
  %322 = vrot.lane.b32.xlu0 %v321, 16
  %v323 = vpop.permute.xlu0 %322
  %vm324 = vcmask 195712
  %325 = vst.msk [vmem:[%s1] sm:$0xff] %vm324, %v323
  %s326 = scalar_lea.vmem %s0, 1
  %s327 = smov 3
  %v328 = vld [vmem:[%s326] ss:$16 sm:%s327]
  %s329 = scalar_lea.vmem %s0, 1
  %s330 = smov 12
  %v331 = vld [vmem:[%s329] ss:$16 sm:%s330]
  %vm332 = vcmask 1043458
  %v333 = vsel %vm332, %v331, %v328
  %s334 = scalar_lea.vmem %s0, 1
  %s335 = smov 48
  %v336 = vld [vmem:[%s334] ss:$16 sm:%s335]
  %vm337 = vcmask 1045508
  %v338 = vsel %vm337, %v336, %v333
  %s339 = scalar_lea.vmem %s0, 1
  %s340 = smov 192
  %v341 = vld [vmem:[%s339] ss:$16 sm:%s340]
  %vm342 = vcmask 1047558
  %v343 = vsel %vm342, %v341, %v338
  %344 = vrot.lane.b32.xlu0 %v343, 8
  %v345 = vpop.permute.xlu0 %344
  %vm346 = vcmask 130112
  %347 = vst.msk [vmem:[%s1] sm:$0xff] %vm346, %v345

// kernel: resblock_pallas.1
$region0: #{resblock_pallas.1}
  #allocation0 [shape = 'u32[]', space=smem, size = 0x4, offset = 0x4, fixed_abs, tag = 'smem constant byte address 0x4 - core index']
  #allocation1 [shape = 'u32[144,128]{1,0:T(1,128)}', space=vmem, size = 0x12000, scoped, tag = 'internal scratch']
  #allocation2 [shape = 'f32[36,128]{1,0:T(8,128)}', space=vmem, size = 0x5000, scoped, tag = 'scratch operand']
  %s0 = inlined_call_operand.vmem [shape: f32[36,128], index: 0, kind: input, shape index: {}]
  %s1 = inlined_call_operand.vmem [shape: bf16[3,128,128], index: 1, kind: input, shape index: {}]
  %s2 = inlined_call_operand.vmem [shape: bf16[3,128,128], index: 2, kind: input, shape index: {}]
  %s3 = inlined_call_operand.vmem [shape: f32[128,8], index: 3, kind: input, shape index: {}]
  %s4 = inlined_call_operand.vmem [shape: f32[8,128], index: 4, kind: input, shape index: {}]
  %s5 = inlined_call_operand.vmem [shape: f32[34,1], index: 5, kind: input, shape index: {}]
  %s6 = inlined_call_operand.vmem [shape: f32[1,8], index: 6, kind: input, shape index: {}]
  %s7 = inlined_call_operand.vmem [shape: f32[1,8], index: 7, kind: input, shape index: {}]
  %s8 = inlined_call_operand.vmem [shape: f32[1,8], index: 8, kind: input, shape index: {}]
  %s9 = inlined_call_operand.vmem [shape: f32[1,8], index: 9, kind: input, shape index: {}]
  %s10 = inlined_call_operand.vmem [shape: f32[36,128], index: 10, kind: output, shape index: {}]
  %s11 = sld [smem:[#allocation0]]
  $region50: #{resblock_pallas.1} parent=0
    _
  %s13 = ssub.s32 1, %s11
  %s14 = scalar_select 0, %s13, %s11
  // Predicated region
  $region2: #{resblock_pallas.1} parent=0 // pred_check
    _
  $region3: #{resblock_pallas.1} parent=0 // pred_check_branch
    %16 = sbr.rel (0) target = $region5
  $region4: #{resblock_pallas.1} parent=0 // pred_region
    _
  $region5: #{resblock_pallas.1} parent=0 // pred_fallthru
    _
  // Predicated region
  $region6: #{resblock_pallas.1} parent=0 // pred_check
    _
  $region7: #{resblock_pallas.1} parent=0 // pred_check_branch
    %18 = sbr.rel (0) target = $region9
  $region8: #{resblock_pallas.1} parent=0 // pred_region
    _
  $region9: #{resblock_pallas.1} parent=0 // pred_fallthru
    _
  // Predicated region
  $region10: #{resblock_pallas.1} parent=0 // pred_check
    _
  $region11: #{resblock_pallas.1} parent=0 // pred_check_branch
    %20 = sbr.rel (0) target = $region13
  $region12: #{resblock_pallas.1} parent=0 // pred_region
    _
  $region13: #{resblock_pallas.1} parent=0 // pred_fallthru
    _
  // Predicated region
  $region14: #{resblock_pallas.1} parent=0 // pred_check
    _
  $region15: #{resblock_pallas.1} parent=0 // pred_check_branch
    %22 = sbr.rel (0) target = $region17
  $region16: #{resblock_pallas.1} parent=0 // pred_region
    _
  $region17: #{resblock_pallas.1} parent=0 // pred_fallthru
    _
  // Predicated region
  $region18: #{resblock_pallas.1} parent=0 // pred_check
    _
  $region19: #{resblock_pallas.1} parent=0 // pred_check_branch
    %24 = sbr.rel (0) target = $region21
  $region20: #{resblock_pallas.1} parent=0 // pred_region
    _
  $region21: #{resblock_pallas.1} parent=0 // pred_fallthru
    _
  // Predicated region
  $region22: #{resblock_pallas.1} parent=0 // pred_check
    _
  $region23: #{resblock_pallas.1} parent=0 // pred_check_branch
    %26 = sbr.rel (0) target = $region25
  $region24: #{resblock_pallas.1} parent=0 // pred_region
    _
  $region25: #{resblock_pallas.1} parent=0 // pred_fallthru
    _
  // Predicated region
  $region26: #{resblock_pallas.1} parent=0 // pred_check
    _
  $region27: #{resblock_pallas.1} parent=0 // pred_check_branch
    %28 = sbr.rel (0) target = $region29
  $region28: #{resblock_pallas.1} parent=0 // pred_region
    _
  $region29: #{resblock_pallas.1} parent=0 // pred_fallthru
    _
  // Predicated region
  $region30: #{resblock_pallas.1} parent=0 // pred_check
    _
  $region31: #{resblock_pallas.1} parent=0 // pred_check_branch
    %30 = sbr.rel (0) target = $region33
  $region32: #{resblock_pallas.1} parent=0 // pred_region
    _
  $region33: #{resblock_pallas.1} parent=0 // pred_fallthru
    _
  // Predicated region
  $region34: #{resblock_pallas.1} parent=0 // pred_check
    _
  $region35: #{resblock_pallas.1} parent=0 // pred_check_branch
    %32 = sbr.rel (0) target = $region37
  $region36: #{resblock_pallas.1} parent=0 // pred_region
    _
  $region37: #{resblock_pallas.1} parent=0 // pred_fallthru
    _
  // Predicated region
  $region38: #{resblock_pallas.1} parent=0 // pred_check
    _
  $region39: #{resblock_pallas.1} parent=0 // pred_check_branch
    %34 = sbr.rel (0) target = $region41
  $region40: #{resblock_pallas.1} parent=0 // pred_region
    _
  $region41: #{resblock_pallas.1} parent=0 // pred_fallthru
    _
  %v36 = vld [vmem:[%s5] sm:$0xff]
  %v37 = vld [vmem:[%s5 + $0x8] sm:$0xff]
  %v38 = vld [vmem:[%s5 + $0x10] sm:$0xff]
  %v39 = vld [vmem:[%s5 + $0x18] sm:$0xff]
  %v40 = vld [vmem:[%s5 + $0x20] sm:$0x3]
  %v41 = vld [vmem:[%s0] sm:$0xff]
  %v42 = vld [vmem:[%s0 + $0x8] sm:$0xff]
  %v43 = vld [vmem:[%s0 + $0x10] sm:$0xff]
  %v44 = vld [vmem:[%s0 + $0x18] sm:$0xff]
  %v45 = vld [vmem:[%s0 + $0x20] sm:$0x3]
  %v46 = vpack.c.bf16 %v42, %v41
  %v47 = vpack.c.bf16 %v44, %v43
  %v48 = vpack.c.bf16 %v45, %v45
  %v49 = vld [vmem:[%s0 + $0x1] sm:$0xff]
  %v50 = vld [vmem:[%s0 + $0x9] sm:$0xff]
  %v51 = vld [vmem:[%s0 + $0x11] sm:$0xff]
  %v52 = vld [vmem:[%s0 + $0x19] sm:$0xff]
  %v53 = vld [vmem:[%s0 + $0x21] sm:$0x3]
  %v54 = vpack.c.bf16 %v50, %v49
  %v55 = vpack.c.bf16 %v52, %v51
  %v56 = vpack.c.bf16 %v53, %v53
  %v57 = vld [vmem:[%s0 + $0x2] sm:$0xff]
  %v58 = vld [vmem:[%s0 + $0xa] sm:$0xff]
  %v59 = vld [vmem:[%s0 + $0x12] sm:$0xff]
  %v60 = vld [vmem:[%s0 + $0x1a] sm:$0xff]
  %v61 = vld [vmem:[%s0 + $0x22] sm:$0x3]
  %v62 = vpack.c.bf16 %v58, %v57
  %v63 = vpack.c.bf16 %v60, %v59
  %v64 = vpack.c.bf16 %v61, %v61
  %v65 = vld [vmem:[%s1] sm:$0xf]
  %v66 = vld [vmem:[%s1 + $0x4] sm:$0xf]
  %v67 = vld [vmem:[%s1 + $0x8] sm:$0xf]
  %v68 = vld [vmem:[%s1 + $0xc] sm:$0xf]
  %v69 = vld [vmem:[%s1 + $0x10] sm:$0xf]
  %v70 = vld [vmem:[%s1 + $0x14] sm:$0xf]
  %v71 = vld [vmem:[%s1 + $0x18] sm:$0xf]
  %v72 = vld [vmem:[%s1 + $0x1c] sm:$0xf]
  %v73 = vld [vmem:[%s1 + $0x20] sm:$0xf]
  %v74 = vld [vmem:[%s1 + $0x24] sm:$0xf]
  %v75 = vld [vmem:[%s1 + $0x28] sm:$0xf]
  %v76 = vld [vmem:[%s1 + $0x2c] sm:$0xf]
  %v77 = vld [vmem:[%s1 + $0x30] sm:$0xf]
  %v78 = vld [vmem:[%s1 + $0x34] sm:$0xf]
  %v79 = vld [vmem:[%s1 + $0x38] sm:$0xf]
  %v80 = vld [vmem:[%s1 + $0x3c] sm:$0xf]
  %s81 = scalar_lea.vmem %s1, 64
  %v82 = vld [vmem:[%s81] sm:$0xf]
  %v83 = vld [vmem:[%s81 + $0x4] sm:$0xf]
  %v84 = vld [vmem:[%s81 + $0x8] sm:$0xf]
  %v85 = vld [vmem:[%s81 + $0xc] sm:$0xf]
  %v86 = vld [vmem:[%s81 + $0x10] sm:$0xf]
  %v87 = vld [vmem:[%s81 + $0x14] sm:$0xf]
  %v88 = vld [vmem:[%s81 + $0x18] sm:$0xf]
  %v89 = vld [vmem:[%s81 + $0x1c] sm:$0xf]
  %v90 = vld [vmem:[%s81 + $0x20] sm:$0xf]
  %v91 = vld [vmem:[%s81 + $0x24] sm:$0xf]
  %v92 = vld [vmem:[%s81 + $0x28] sm:$0xf]
  %v93 = vld [vmem:[%s81 + $0x2c] sm:$0xf]
  %v94 = vld [vmem:[%s81 + $0x30] sm:$0xf]
  %v95 = vld [vmem:[%s81 + $0x34] sm:$0xf]
  %v96 = vld [vmem:[%s81 + $0x38] sm:$0xf]
  %v97 = vld [vmem:[%s81 + $0x3c] sm:$0xf]
  %v114 = vunpack.c.l.b16 %v82
  %v115 = vunpack.c.l.b16 %v83
  %v116 = vunpack.c.l.b16 %v84
  %v117 = vunpack.c.l.b16 %v85
  %v118 = vunpack.c.l.b16 %v86
  %v119 = vunpack.c.l.b16 %v87
  %v120 = vunpack.c.l.b16 %v88
  %v121 = vunpack.c.l.b16 %v89
  %v122 = vunpack.c.l.b16 %v90
  %v123 = vunpack.c.l.b16 %v91
  %v124 = vunpack.c.l.b16 %v92
  %v125 = vunpack.c.l.b16 %v93
  %v126 = vunpack.c.l.b16 %v94
  %v127 = vunpack.c.l.b16 %v95
  %v128 = vunpack.c.l.b16 %v96
  %v129 = vunpack.c.l.b16 %v97
  %v130 = vpack.c.b16 %v115, %v114
  %v131 = vpack.c.b16 %v117, %v116
  %v132 = vpack.c.b16 %v119, %v118
  %v133 = vpack.c.b16 %v121, %v120
  %v134 = vpack.c.b16 %v123, %v122
  %v135 = vpack.c.b16 %v125, %v124
  %v136 = vpack.c.b16 %v127, %v126
  %v137 = vpack.c.b16 %v129, %v128
  %146 = vmatprep.subr.bf16.mxu0 0
  %147 = vmatpush1.bf16.msra.mxu0 %v137
  %148 = vmatprep.subr.bf16.mxu0 0
  %149 = vmatpush1.bf16.msra.mxu0 %v136
  %150 = vmatprep.subr.bf16.mxu0 0
  %151 = vmatpush1.bf16.msra.mxu0 %v135
  %152 = vmatprep.subr.bf16.mxu0 0
  %153 = vmatpush1.bf16.msra.mxu0 %v134
  %154 = vmatprep.subr.bf16.mxu0 0
  %155 = vmatpush1.bf16.msra.mxu0 %v133
  %156 = vmatprep.subr.bf16.mxu0 0
  %157 = vmatpush1.bf16.msra.mxu0 %v132
  %158 = vmatprep.subr.bf16.mxu0 0
  %159 = vmatpush1.bf16.msra.mxu0 %v131
  %160 = vmatprep.subr.bf16.mxu0 0
  %161 = vmatpush1.bf16.msra.mxu0 %v130
  %162 = vmatprep.subr.bf16.mxu0 0
  %163 = vmatpush2.bf16.msra.mxu0 0
  %164 = vmatprep.subr.bf16.mxu0 0
  %165 = vmatpush2.bf16.msra.mxu0 0
  %166 = vmatprep.subr.bf16.mxu0 0
  %167 = vmatpush2.bf16.msra.mxu0 0
  %168 = vmatprep.subr.bf16.mxu0 0
  %169 = vmatpush2.bf16.msra.mxu0 0
  %170 = vmatprep.subr.bf16.mxu0 0
  %171 = vmatpush2.bf16.msra.mxu0 0
  %172 = vmatprep.subr.bf16.mxu0 0
  %173 = vmatpush2.bf16.msra.mxu0 0
  %174 = vmatprep.subr.bf16.mxu0 0
  %175 = vmatpush2.bf16.msra.mxu0 0
  %176 = vmatprep.subr.bf16.mxu0 0
  %177 = vmatpush2.bf16.msra.mxu0 0
  %178 = vmatprep.mubr.bf16.mxu0 0
  %179 = vmatmul.mubr.bf16.gmra.mxu0 %v54
  %v180 = vpop.f32.mrf.mxu0
  %v181 = vadd.f32 0.0, %v180
  %v182 = vpop.f32.mrf.mxu0
  %v183 = vpop.f32.mrf.mxu0
  %v184 = vadd.f32 0.0, %v183
  %v185 = vpop.f32.mrf.mxu0
  %186 = vmatprep.mubr.bf16.mxu0 0
  %187 = vmatmul.mubr.bf16.gmra.mxu0 %v55
  %v188 = vpop.f32.mrf.mxu0
  %v189 = vadd.f32 0.0, %v188
  %v190 = vpop.f32.mrf.mxu0
  %v191 = vpop.f32.mrf.mxu0
  %v192 = vadd.f32 0.0, %v191
  %v193 = vpop.f32.mrf.mxu0
  %194 = vmatprep.mubr.bf16.mxu0 0
  %195 = vmatmul.mubr.bf16.gmra.mxu0 %v56
  %v196 = vpop.f32.mrf.mxu0
  %v197 = vadd.f32 0.0, %v196
  %v198 = vpop.f32.mrf.mxu0
  %v199 = vpop.f32.mrf.mxu0
  %v200 = vpop.f32.mrf.mxu0
  %201 = vdwg.mxu0
  %v218 = vunpack.c.l.b16 %v65
  %v219 = vunpack.c.l.b16 %v66
  %v220 = vunpack.c.l.b16 %v67
  %v221 = vunpack.c.l.b16 %v68
  %v222 = vunpack.c.l.b16 %v69
  %v223 = vunpack.c.l.b16 %v70
  %v224 = vunpack.c.l.b16 %v71
  %v225 = vunpack.c.l.b16 %v72
  %v226 = vunpack.c.l.b16 %v73
  %v227 = vunpack.c.l.b16 %v74
  %v228 = vunpack.c.l.b16 %v75
  %v229 = vunpack.c.l.b16 %v76
  %v230 = vunpack.c.l.b16 %v77
  %v231 = vunpack.c.l.b16 %v78
  %v232 = vunpack.c.l.b16 %v79
  %v233 = vunpack.c.l.b16 %v80
  %v234 = vpack.c.b16 %v219, %v218
  %v235 = vpack.c.b16 %v221, %v220
  %v236 = vpack.c.b16 %v223, %v222
  %v237 = vpack.c.b16 %v225, %v224
  %v238 = vpack.c.b16 %v227, %v226
  %v239 = vpack.c.b16 %v229, %v228
  %v240 = vpack.c.b16 %v231, %v230
  %v241 = vpack.c.b16 %v233, %v232
  %250 = vmatprep.subr.bf16.mxu0 0
  %251 = vmatpush1.bf16.msra.mxu0 %v241
  %252 = vmatprep.subr.bf16.mxu0 0
  %253 = vmatpush1.bf16.msra.mxu0 %v240
  %254 = vmatprep.subr.bf16.mxu0 0
  %255 = vmatpush1.bf16.msra.mxu0 %v239
  %256 = vmatprep.subr.bf16.mxu0 0
  %257 = vmatpush1.bf16.msra.mxu0 %v238
  %258 = vmatprep.subr.bf16.mxu0 0
  %259 = vmatpush1.bf16.msra.mxu0 %v237
  %260 = vmatprep.subr.bf16.mxu0 0
  %261 = vmatpush1.bf16.msra.mxu0 %v236
  %262 = vmatprep.subr.bf16.mxu0 0
  %263 = vmatpush1.bf16.msra.mxu0 %v235
  %264 = vmatprep.subr.bf16.mxu0 0
  %265 = vmatpush1.bf16.msra.mxu0 %v234
  %266 = vmatprep.subr.bf16.mxu0 0
  %267 = vmatpush2.bf16.msra.mxu0 0
  %268 = vmatprep.subr.bf16.mxu0 0
  %269 = vmatpush2.bf16.msra.mxu0 0
  %270 = vmatprep.subr.bf16.mxu0 0
  %271 = vmatpush2.bf16.msra.mxu0 0
  %272 = vmatprep.subr.bf16.mxu0 0
  %273 = vmatpush2.bf16.msra.mxu0 0
  %274 = vmatprep.subr.bf16.mxu0 0
  %275 = vmatpush2.bf16.msra.mxu0 0
  %276 = vmatprep.subr.bf16.mxu0 0
  %277 = vmatpush2.bf16.msra.mxu0 0
  %278 = vmatprep.subr.bf16.mxu0 0
  %279 = vmatpush2.bf16.msra.mxu0 0
  %280 = vmatprep.subr.bf16.mxu0 0
  %281 = vmatpush2.bf16.msra.mxu0 0
  %282 = vmatprep.mubr.bf16.mxu0 0
  %283 = vmatmul.mubr.bf16.gmra.mxu0 %v46
  %v284 = vpop.f32.mrf.mxu0
  %v285 = vadd.f32 %v181, %v284
  %v286 = vpop.f32.mrf.mxu0
  %v287 = vpop.f32.mrf.mxu0
  %v288 = vadd.f32 %v184, %v287
  %v289 = vpop.f32.mrf.mxu0
  %290 = vmatprep.mubr.bf16.mxu0 0
  %291 = vmatmul.mubr.bf16.gmra.mxu0 %v47
  %v292 = vpop.f32.mrf.mxu0
  %v293 = vadd.f32 %v189, %v292
  %v294 = vpop.f32.mrf.mxu0
  %v295 = vpop.f32.mrf.mxu0
  %v296 = vadd.f32 %v192, %v295
  %v297 = vpop.f32.mrf.mxu0
  %298 = vmatprep.mubr.bf16.mxu0 0
  %299 = vmatmul.mubr.bf16.gmra.mxu0 %v48
  %v300 = vpop.f32.mrf.mxu0
  %v301 = vadd.f32 %v197, %v300
  %v302 = vpop.f32.mrf.mxu0
  %v303 = vpop.f32.mrf.mxu0
  %v304 = vpop.f32.mrf.mxu0
  %305 = vdwg.mxu0
  %s306 = scalar_lea.vmem %s1, 128
  %v307 = vld [vmem:[%s306] sm:$0xf]
  %v308 = vld [vmem:[%s306 + $0x4] sm:$0xf]
  %v309 = vld [vmem:[%s306 + $0x8] sm:$0xf]
  %v310 = vld [vmem:[%s306 + $0xc] sm:$0xf]
  %v311 = vld [vmem:[%s306 + $0x10] sm:$0xf]
  %v312 = vld [vmem:[%s306 + $0x14] sm:$0xf]
  %v313 = vld [vmem:[%s306 + $0x18] sm:$0xf]
  %v314 = vld [vmem:[%s306 + $0x1c] sm:$0xf]
  %v315 = vld [vmem:[%s306 + $0x20] sm:$0xf]
  %v316 = vld [vmem:[%s306 + $0x24] sm:$0xf]
  %v317 = vld [vmem:[%s306 + $0x28] sm:$0xf]
  %v318 = vld [vmem:[%s306 + $0x2c] sm:$0xf]
  %v319 = vld [vmem:[%s306 + $0x30] sm:$0xf]
  %v320 = vld [vmem:[%s306 + $0x34] sm:$0xf]
  %v321 = vld [vmem:[%s306 + $0x38] sm:$0xf]
  %v322 = vld [vmem:[%s306 + $0x3c] sm:$0xf]
  %v339 = vunpack.c.l.b16 %v307
  %v340 = vunpack.c.l.b16 %v308
  %v341 = vunpack.c.l.b16 %v309
  %v342 = vunpack.c.l.b16 %v310
  %v343 = vunpack.c.l.b16 %v311
  %v344 = vunpack.c.l.b16 %v312
  %v345 = vunpack.c.l.b16 %v313
  %v346 = vunpack.c.l.b16 %v314
  %v347 = vunpack.c.l.b16 %v315
  %v348 = vunpack.c.l.b16 %v316
  %v349 = vunpack.c.l.b16 %v317
  %v350 = vunpack.c.l.b16 %v318
  %v351 = vunpack.c.l.b16 %v319
  %v352 = vunpack.c.l.b16 %v320
  %v353 = vunpack.c.l.b16 %v321
  %v354 = vunpack.c.l.b16 %v322
  %v355 = vpack.c.b16 %v340, %v339
  %v356 = vpack.c.b16 %v342, %v341
  %v357 = vpack.c.b16 %v344, %v343
  %v358 = vpack.c.b16 %v346, %v345
  %v359 = vpack.c.b16 %v348, %v347
  %v360 = vpack.c.b16 %v350, %v349
  %v361 = vpack.c.b16 %v352, %v351
  %v362 = vpack.c.b16 %v354, %v353
  %371 = vmatprep.subr.bf16.mxu0 0
  %372 = vmatpush1.bf16.msra.mxu0 %v362
  %373 = vmatprep.subr.bf16.mxu0 0
  %374 = vmatpush1.bf16.msra.mxu0 %v361
  %375 = vmatprep.subr.bf16.mxu0 0
  %376 = vmatpush1.bf16.msra.mxu0 %v360
  %377 = vmatprep.subr.bf16.mxu0 0
  %378 = vmatpush1.bf16.msra.mxu0 %v359
  %379 = vmatprep.subr.bf16.mxu0 0
  %380 = vmatpush1.bf16.msra.mxu0 %v358
  %381 = vmatprep.subr.bf16.mxu0 0
  %382 = vmatpush1.bf16.msra.mxu0 %v357
  %383 = vmatprep.subr.bf16.mxu0 0
  %384 = vmatpush1.bf16.msra.mxu0 %v356
  %385 = vmatprep.subr.bf16.mxu0 0
  %386 = vmatpush1.bf16.msra.mxu0 %v355
  %387 = vmatprep.subr.bf16.mxu0 0
  %388 = vmatpush2.bf16.msra.mxu0 0
  %389 = vmatprep.subr.bf16.mxu0 0
  %390 = vmatpush2.bf16.msra.mxu0 0
  %391 = vmatprep.subr.bf16.mxu0 0
  %392 = vmatpush2.bf16.msra.mxu0 0
  %393 = vmatprep.subr.bf16.mxu0 0
  %394 = vmatpush2.bf16.msra.mxu0 0
  %395 = vmatprep.subr.bf16.mxu0 0
  %396 = vmatpush2.bf16.msra.mxu0 0
  %397 = vmatprep.subr.bf16.mxu0 0
  %398 = vmatpush2.bf16.msra.mxu0 0
  %399 = vmatprep.subr.bf16.mxu0 0
  %400 = vmatpush2.bf16.msra.mxu0 0
  %401 = vmatprep.subr.bf16.mxu0 0
  %402 = vmatpush2.bf16.msra.mxu0 0
  %403 = vmatprep.mubr.bf16.mxu0 0
  %404 = vmatmul.mubr.bf16.gmra.mxu0 %v62
  %v405 = vpop.f32.mrf.mxu0
  %v406 = vadd.f32 0.0, %v405
  %v407 = vpop.f32.mrf.mxu0
  %v408 = vpop.f32.mrf.mxu0
  %v409 = vadd.f32 0.0, %v408
  %v410 = vpop.f32.mrf.mxu0
  %411 = vmatprep.mubr.bf16.mxu0 0
  %412 = vmatmul.mubr.bf16.gmra.mxu0 %v63
  %v413 = vpop.f32.mrf.mxu0
  %v414 = vadd.f32 0.0, %v413
  %v415 = vpop.f32.mrf.mxu0
  %v416 = vpop.f32.mrf.mxu0
  %v417 = vadd.f32 0.0, %v416
  %v418 = vpop.f32.mrf.mxu0
  %419 = vmatprep.mubr.bf16.mxu0 0
  %420 = vmatmul.mubr.bf16.gmra.mxu0 %v64
  %v421 = vpop.f32.mrf.mxu0
  %v422 = vadd.f32 0.0, %v421
  %v423 = vpop.f32.mrf.mxu0
  %v424 = vpop.f32.mrf.mxu0
  %v425 = vpop.f32.mrf.mxu0
  %426 = vdwg.mxu0
  %v427 = vadd.f32 %v285, %v406
  %v428 = vadd.f32 %v288, %v409
  %v429 = vadd.f32 %v293, %v414
  %v430 = vadd.f32 %v296, %v417
  %v431 = vadd.f32 %v301, %v422
  %433 = vset.pattern.permute.xlu0 0
  %434 = vperm.xlu0 %433, %v36
  %v435 = vpop.permute.xlu0 %434
  %438 = vset.pattern.permute.xlu0 0
  %439 = vperm.xlu0 %438, %v37
  %v440 = vpop.permute.xlu0 %439
  %443 = vset.pattern.permute.xlu0 0
  %444 = vperm.xlu0 %443, %v38
  %v445 = vpop.permute.xlu0 %444
  %448 = vset.pattern.permute.xlu0 0
  %449 = vperm.xlu0 %448, %v39
  %v450 = vpop.permute.xlu0 %449
  %453 = vset.pattern.permute.xlu0 0
  %454 = vperm.xlu0 %453, %v40
  %v455 = vpop.permute.xlu0 %454
  %v457 = vmul.f32 %v427, %v435
  %v458 = vmul.f32 %v428, %v440
  %v459 = vmul.f32 %v429, %v445
  %v460 = vmul.f32 %v430, %v450
  %v461 = vmul.f32 %v431, %v455
  %v462 = vadd.f32 %v457, %v458
  %v463 = vadd.f32 %v462, %v459
  %v464 = vadd.f32 %v463, %v460
  %vm465 = vcmask 1041408
  %v466 = vsel %vm465, %v461, 0.0
  %v467 = vadd.f32 %v464, %v466
  %v468 = vrot.slane %v467, 4
  %v469 = vadd.f32 %v467, %v468
  %v470 = vrot.slane %v469, 2
  %v471 = vadd.f32 %v469, %v470
  %v472 = vrot.slane %v471, 1
  %v473 = vadd.f32 %v471, %v472
  %v474 = vmul.f32 %v457, %v427
  %v475 = vmul.f32 %v458, %v428
  %v476 = vmul.f32 %v459, %v429
  %v477 = vmul.f32 %v460, %v430
  %v478 = vmul.f32 %v461, %v431
  %v479 = vadd.f32 %v474, %v475
  %v480 = vadd.f32 %v479, %v476
  %v481 = vadd.f32 %v480, %v477
  %v482 = vsel %vm465, %v478, 0.0
  %v483 = vadd.f32 %v481, %v482
  %v484 = vrot.slane %v483, 4
  %v485 = vadd.f32 %v483, %v484
  %v486 = vrot.slane %v485, 2
  %v487 = vadd.f32 %v485, %v486
  %v488 = vrot.slane %v487, 1
  %v489 = vadd.f32 %v487, %v488
  %vm490 = vcmask 1040384
  %v491 = vsel %vm490, %v473, %v489
  %v492 = vld [vmem:[%s3] sm:$0xff]
  %v493 = vld [vmem:[%s3 + $0x8] sm:$0xff]
  %v494 = vld [vmem:[%s3 + $0x10] sm:$0xff]
  %v495 = vld [vmem:[%s3 + $0x18] sm:$0xff]
  %v496 = vld [vmem:[%s3 + $0x20] sm:$0xff]
  %v497 = vld [vmem:[%s3 + $0x28] sm:$0xff]
  %v498 = vld [vmem:[%s3 + $0x30] sm:$0xff]
  %v499 = vld [vmem:[%s3 + $0x38] sm:$0xff]
  %v500 = vld [vmem:[%s3 + $0x40] sm:$0xff]
  %v501 = vld [vmem:[%s3 + $0x48] sm:$0xff]
  %v502 = vld [vmem:[%s3 + $0x50] sm:$0xff]
  %v503 = vld [vmem:[%s3 + $0x58] sm:$0xff]
  %v504 = vld [vmem:[%s3 + $0x60] sm:$0xff]
  %v505 = vld [vmem:[%s3 + $0x68] sm:$0xff]
  %v506 = vld [vmem:[%s3 + $0x70] sm:$0xff]
  %v507 = vld [vmem:[%s3 + $0x78] sm:$0xff]
  %508 = vmatprep.subr.mxu0 0.0
  %509 = vmatpush1.msra.mxu0 %v507
  %510 = vmatprep.subr.mxu0 0.0
  %511 = vmatpush1.msra.mxu0 %v506
  %512 = vmatprep.subr.mxu0 0.0
  %513 = vmatpush1.msra.mxu0 %v505
  %514 = vmatprep.subr.mxu0 0.0
  %515 = vmatpush1.msra.mxu0 %v504
  %516 = vmatprep.subr.mxu0 0.0
  %517 = vmatpush1.msra.mxu0 %v503
  %518 = vmatprep.subr.mxu0 0.0
  %519 = vmatpush1.msra.mxu0 %v502
  %520 = vmatprep.subr.mxu0 0.0
  %521 = vmatpush1.msra.mxu0 %v501
  %522 = vmatprep.subr.mxu0 0.0
  %523 = vmatpush1.msra.mxu0 %v500
  %524 = vmatprep.subr.mxu0 0.0
  %525 = vmatpush1.msra.mxu0 %v499
  %526 = vmatprep.subr.mxu0 0.0
  %527 = vmatpush1.msra.mxu0 %v498
  %528 = vmatprep.subr.mxu0 0.0
  %529 = vmatpush1.msra.mxu0 %v497
  %530 = vmatprep.subr.mxu0 0.0
  %531 = vmatpush1.msra.mxu0 %v496
  %532 = vmatprep.subr.mxu0 0.0
  %533 = vmatpush1.msra.mxu0 %v495
  %534 = vmatprep.subr.mxu0 0.0
  %535 = vmatpush1.msra.mxu0 %v494
  %536 = vmatprep.subr.mxu0 0.0
  %537 = vmatpush1.msra.mxu0 %v493
  %538 = vmatprep.subr.mxu0 0.0
  %539 = vmatpush1.msra.mxu0 %v492
  %540 = vmatprep.subr.mxu0 0.0
  %541 = vmatpush2.msra.mxu0 0.0
  %542 = vmatprep.subr.mxu0 0.0
  %543 = vmatpush2.msra.mxu0 0.0
  %544 = vmatprep.subr.mxu0 0.0
  %545 = vmatpush2.msra.mxu0 0.0
  %546 = vmatprep.subr.mxu0 0.0
  %547 = vmatpush2.msra.mxu0 0.0
  %548 = vmatprep.subr.mxu0 0.0
  %549 = vmatpush2.msra.mxu0 0.0
  %550 = vmatprep.subr.mxu0 0.0
  %551 = vmatpush2.msra.mxu0 0.0
  %552 = vmatprep.subr.mxu0 0.0
  %553 = vmatpush2.msra.mxu0 0.0
  %554 = vmatprep.subr.mxu0 0.0
  %555 = vmatpush2.msra.mxu0 0.0
  %556 = vmatprep.subr.mxu0 0.0
  %557 = vmatpush2.msra.mxu0 0.0
  %558 = vmatprep.subr.mxu0 0.0
  %559 = vmatpush2.msra.mxu0 0.0
  %560 = vmatprep.subr.mxu0 0.0
  %561 = vmatpush2.msra.mxu0 0.0
  %562 = vmatprep.subr.mxu0 0.0
  %563 = vmatpush2.msra.mxu0 0.0
  %564 = vmatprep.subr.mxu0 0.0
  %565 = vmatpush2.msra.mxu0 0.0
  %566 = vmatprep.subr.mxu0 0.0
  %567 = vmatpush2.msra.mxu0 0.0
  %568 = vmatprep.subr.mxu0 0.0
  %569 = vmatpush2.msra.mxu0 0.0
  %570 = vmatprep.subr.mxu0 0.0
  %571 = vmatpush2.msra.mxu0 0.0
  %572 = vmatprep.mubr.f32.mxu0 0.0
  %573 = vmatmul.mubr.f32.gmra.mxu0 %v491
  %v574 = vpop.f32.mrf.mxu0
  %v575 = vadd.f32 0.0, %v574
  %v576 = vpop.f32.mrf.mxu0
  %577 = vdwg.mxu0
  %v578 = vmul.f32 %v575, 0.001953125
  %v579 = vmul.f32 %v578, %v578
  %v581 = vrot.slane %v579, 7
  %v583 = vsub.f32 %v578, %v581
  %v584 = vmax.f32 %v583, 0.0
  %v585 = vld [vmem:[%s6] sm:$0x1]
  %v586 = vadd.f32 %v584, 1e-05
  %v587 = vrsqrt.pop %v586
  %v590 = vunpack.c.l.s4 1966171168
  %v591 = vunpack.c.0.s8 %v590
  %v592 = vlaneseq
  %v593 = vshrl.u32 %v592, 7
  %v594 = vsub.s32 %v591, %v593
  %v595 = vrot.slane %v587, %v594
  %v596 = vcombine.high %v595, %v595
  %v598 = vunpack.c.l.s4 1966171168
  %v599 = vunpack.c.0.s8 %v598
  %v600 = vlaneseq
  %v601 = vshrl.u32 %v600, 7
  %v602 = vsub.s32 %v599, %v601
  %v603 = vrot.slane %v596, %v602
  %v605 = vmul.f32 %v585, %v603
  %v606 = vld [vmem:[%s7] sm:$0x1]
  %v607 = vmul.f32 %v578, %v605
  %v608 = vsub.f32 %v606, %v607
  %v610 = vlaneseq
  %v611 = vshrl.u32 %v610, 7
  %v612 = vsub.s32 0, %v611
  %v613 = vrot.slane %v608, %v612
  %v615 = vsel %vm490, %v605, %v613
  %v616 = vld [vmem:[%s4] sm:$0xff]
  %vm617 = vcmask 64512
  %v619 = vsel %vm617, %v615, 0
  %621 = vmatprep.subr.mxu0 0.0
  %622 = vmatpush1.msra.mxu0 0.0
  %623 = vmatprep.subr.mxu0 0.0
  %624 = vmatpush1.msra.mxu0 0.0
  %625 = vmatprep.subr.mxu0 0.0
  %626 = vmatpush1.msra.mxu0 0.0
  %627 = vmatprep.subr.mxu0 0.0
  %628 = vmatpush1.msra.mxu0 0.0
  %629 = vmatprep.subr.mxu0 0.0
  %630 = vmatpush1.msra.mxu0 0.0
  %631 = vmatprep.subr.mxu0 0.0
  %632 = vmatpush1.msra.mxu0 0.0
  %633 = vmatprep.subr.mxu0 0.0
  %634 = vmatpush1.msra.mxu0 0.0
  %635 = vmatprep.subr.mxu0 0.0
  %636 = vmatpush1.msra.mxu0 0.0
  %637 = vmatprep.subr.mxu0 0.0
  %638 = vmatpush1.msra.mxu0 0.0
  %639 = vmatprep.subr.mxu0 0.0
  %640 = vmatpush1.msra.mxu0 0.0
  %641 = vmatprep.subr.mxu0 0.0
  %642 = vmatpush1.msra.mxu0 0.0
  %643 = vmatprep.subr.mxu0 0.0
  %644 = vmatpush1.msra.mxu0 0.0
  %645 = vmatprep.subr.mxu0 0.0
  %646 = vmatpush1.msra.mxu0 0.0
  %647 = vmatprep.subr.mxu0 0.0
  %648 = vmatpush1.msra.mxu0 0.0
  %649 = vmatprep.subr.mxu0 0.0
  %650 = vmatpush1.msra.mxu0 0.0
  %651 = vmatprep.subr.mxu0 0.0
  %652 = vmatpush1.msra.mxu0 %v616
  %653 = vmatprep.subr.mxu0 0.0
  %654 = vmatpush2.msra.mxu0 0.0
  %655 = vmatprep.subr.mxu0 0.0
  %656 = vmatpush2.msra.mxu0 0.0
  %657 = vmatprep.subr.mxu0 0.0
  %658 = vmatpush2.msra.mxu0 0.0
  %659 = vmatprep.subr.mxu0 0.0
  %660 = vmatpush2.msra.mxu0 0.0
  %661 = vmatprep.subr.mxu0 0.0
  %662 = vmatpush2.msra.mxu0 0.0
  %663 = vmatprep.subr.mxu0 0.0
  %664 = vmatpush2.msra.mxu0 0.0
  %665 = vmatprep.subr.mxu0 0.0
  %666 = vmatpush2.msra.mxu0 0.0
  %667 = vmatprep.subr.mxu0 0.0
  %668 = vmatpush2.msra.mxu0 0.0
  %669 = vmatprep.subr.mxu0 0.0
  %670 = vmatpush2.msra.mxu0 0.0
  %671 = vmatprep.subr.mxu0 0.0
  %672 = vmatpush2.msra.mxu0 0.0
  %673 = vmatprep.subr.mxu0 0.0
  %674 = vmatpush2.msra.mxu0 0.0
  %675 = vmatprep.subr.mxu0 0.0
  %676 = vmatpush2.msra.mxu0 0.0
  %677 = vmatprep.subr.mxu0 0.0
  %678 = vmatpush2.msra.mxu0 0.0
  %679 = vmatprep.subr.mxu0 0.0
  %680 = vmatpush2.msra.mxu0 0.0
  %681 = vmatprep.subr.mxu0 0.0
  %682 = vmatpush2.msra.mxu0 0.0
  %683 = vmatprep.subr.mxu0 0.0
  %684 = vmatpush2.msra.mxu0 0.0
  %685 = vmatprep.mubr.f32.mxu0 0.0
  %686 = vmatmul.mubr.f32.gmra.mxu0 %v619
  %v687 = vpop.f32.mrf.mxu0
  %v688 = vadd.f32 0.0, %v687
  %v689 = vpop.f32.mrf.mxu0
  %690 = vdwg.mxu0
  %v691 = vlaneseq
  %v692 = vshrl.u32 %v691, 7
  %v693 = vsub.s32 0, %v692
  %v694 = vrot.slane %v688, %v693
  %v695 = vmul.f32 %v427, %v694
  %v696 = vmul.f32 %v428, %v694
  %v697 = vmul.f32 %v429, %v694
  %v698 = vmul.f32 %v430, %v694
  %v699 = vmul.f32 %v431, %v694
  %v700 = vlaneseq
  %v701 = vshrl.u32 %v700, 7
  %v702 = vsub.s32 1, %v701
  %v703 = vrot.slane %v688, %v702
  %v704 = vadd.f32 %v695, %v703
  %v705 = vadd.f32 %v696, %v703
  %v706 = vadd.f32 %v697, %v703
  %v707 = vadd.f32 %v698, %v703
  %v708 = vadd.f32 %v699, %v703
  %v709 = vmax.f32 %v704, 0.0
  %v710 = vmax.f32 %v705, 0.0
  %v711 = vmax.f32 %v706, 0.0
  %v712 = vmax.f32 %v707, 0.0
  %v713 = vmax.f32 %v708, 0.0
  %v714 = vmul.f32 %v709, %v435
  %v715 = vmul.f32 %v710, %v440
  %v716 = vmul.f32 %v711, %v445
  %v717 = vmul.f32 %v712, %v450
  %v718 = vmul.f32 %v713, %v455
  %719 = vst [vmem:[#allocation2] sm:$0x1] 0.0
  %720 = vst [vmem:[#allocation2 + $0x23] sm:$0x1] 0.0
  %721 = vst [vmem:[#allocation2 + $0x1] sm:$0xff] %v714
  %722 = vst [vmem:[#allocation2 + $0x9] sm:$0xff] %v715
  %723 = vst [vmem:[#allocation2 + $0x11] sm:$0xff] %v716
  %724 = vst [vmem:[#allocation2 + $0x19] sm:$0xff] %v717
  %725 = vst [vmem:[#allocation2 + $0x21] sm:$0x3] %v718
  %v726 = vpack.c.bf16 %v715, %v714
  %v727 = vpack.c.bf16 %v717, %v716
  %v728 = vpack.c.bf16 %v718, %v718
  %v729 = vld [vmem:[#allocation2] sm:$0xff]
  %v730 = vld [vmem:[#allocation2 + $0x8] sm:$0xff]
  %v731 = vld [vmem:[#allocation2 + $0x10] sm:$0xff]
  %v732 = vld [vmem:[#allocation2 + $0x18] sm:$0xff]
  %v733 = vld [vmem:[#allocation2 + $0x20] sm:$0x3]
  %v734 = vpack.c.bf16 %v730, %v729
  %v735 = vpack.c.bf16 %v732, %v731
  %v736 = vpack.c.bf16 %v733, %v733
  %v737 = vld [vmem:[#allocation2 + $0x2] sm:$0xff]
  %v738 = vld [vmem:[#allocation2 + $0xa] sm:$0xff]
  %v739 = vld [vmem:[#allocation2 + $0x12] sm:$0xff]
  %v740 = vld [vmem:[#allocation2 + $0x1a] sm:$0xff]
  %v741 = vld [vmem:[#allocation2 + $0x22] sm:$0x3]
  %v742 = vpack.c.bf16 %v738, %v737
  %v743 = vpack.c.bf16 %v740, %v739
  %v744 = vpack.c.bf16 %v741, %v741
  %v745 = vld [vmem:[%s2] sm:$0xf]
  %v746 = vld [vmem:[%s2 + $0x4] sm:$0xf]
  %v747 = vld [vmem:[%s2 + $0x8] sm:$0xf]
  %v748 = vld [vmem:[%s2 + $0xc] sm:$0xf]
  %v749 = vld [vmem:[%s2 + $0x10] sm:$0xf]
  %v750 = vld [vmem:[%s2 + $0x14] sm:$0xf]
  %v751 = vld [vmem:[%s2 + $0x18] sm:$0xf]
  %v752 = vld [vmem:[%s2 + $0x1c] sm:$0xf]
  %v753 = vld [vmem:[%s2 + $0x20] sm:$0xf]
  %v754 = vld [vmem:[%s2 + $0x24] sm:$0xf]
  %v755 = vld [vmem:[%s2 + $0x28] sm:$0xf]
  %v756 = vld [vmem:[%s2 + $0x2c] sm:$0xf]
  %v757 = vld [vmem:[%s2 + $0x30] sm:$0xf]
  %v758 = vld [vmem:[%s2 + $0x34] sm:$0xf]
  %v759 = vld [vmem:[%s2 + $0x38] sm:$0xf]
  %v760 = vld [vmem:[%s2 + $0x3c] sm:$0xf]
  %s761 = scalar_lea.vmem %s2, 64
  %v762 = vld [vmem:[%s761] sm:$0xf]
  %v763 = vld [vmem:[%s761 + $0x4] sm:$0xf]
  %v764 = vld [vmem:[%s761 + $0x8] sm:$0xf]
  %v765 = vld [vmem:[%s761 + $0xc] sm:$0xf]
  %v766 = vld [vmem:[%s761 + $0x10] sm:$0xf]
  %v767 = vld [vmem:[%s761 + $0x14] sm:$0xf]
  %v768 = vld [vmem:[%s761 + $0x18] sm:$0xf]
  %v769 = vld [vmem:[%s761 + $0x1c] sm:$0xf]
  %v770 = vld [vmem:[%s761 + $0x20] sm:$0xf]
  %v771 = vld [vmem:[%s761 + $0x24] sm:$0xf]
  %v772 = vld [vmem:[%s761 + $0x28] sm:$0xf]
  %v773 = vld [vmem:[%s761 + $0x2c] sm:$0xf]
  %v774 = vld [vmem:[%s761 + $0x30] sm:$0xf]
  %v775 = vld [vmem:[%s761 + $0x34] sm:$0xf]
  %v776 = vld [vmem:[%s761 + $0x38] sm:$0xf]
  %v777 = vld [vmem:[%s761 + $0x3c] sm:$0xf]
  %v794 = vunpack.c.l.b16 %v762
  %v795 = vunpack.c.l.b16 %v763
  %v796 = vunpack.c.l.b16 %v764
  %v797 = vunpack.c.l.b16 %v765
  %v798 = vunpack.c.l.b16 %v766
  %v799 = vunpack.c.l.b16 %v767
  %v800 = vunpack.c.l.b16 %v768
  %v801 = vunpack.c.l.b16 %v769
  %v802 = vunpack.c.l.b16 %v770
  %v803 = vunpack.c.l.b16 %v771
  %v804 = vunpack.c.l.b16 %v772
  %v805 = vunpack.c.l.b16 %v773
  %v806 = vunpack.c.l.b16 %v774
  %v807 = vunpack.c.l.b16 %v775
  %v808 = vunpack.c.l.b16 %v776
  %v809 = vunpack.c.l.b16 %v777
  %v810 = vpack.c.b16 %v795, %v794
  %v811 = vpack.c.b16 %v797, %v796
  %v812 = vpack.c.b16 %v799, %v798
  %v813 = vpack.c.b16 %v801, %v800
  %v814 = vpack.c.b16 %v803, %v802
  %v815 = vpack.c.b16 %v805, %v804
  %v816 = vpack.c.b16 %v807, %v806
  %v817 = vpack.c.b16 %v809, %v808
  %826 = vmatprep.subr.bf16.mxu0 0
  %827 = vmatpush1.bf16.msra.mxu0 %v817
  %828 = vmatprep.subr.bf16.mxu0 0
  %829 = vmatpush1.bf16.msra.mxu0 %v816
  %830 = vmatprep.subr.bf16.mxu0 0
  %831 = vmatpush1.bf16.msra.mxu0 %v815
  %832 = vmatprep.subr.bf16.mxu0 0
  %833 = vmatpush1.bf16.msra.mxu0 %v814
  %834 = vmatprep.subr.bf16.mxu0 0
  %835 = vmatpush1.bf16.msra.mxu0 %v813
  %836 = vmatprep.subr.bf16.mxu0 0
  %837 = vmatpush1.bf16.msra.mxu0 %v812
  %838 = vmatprep.subr.bf16.mxu0 0
  %839 = vmatpush1.bf16.msra.mxu0 %v811
  %840 = vmatprep.subr.bf16.mxu0 0
  %841 = vmatpush1.bf16.msra.mxu0 %v810
  %842 = vmatprep.subr.bf16.mxu0 0
  %843 = vmatpush2.bf16.msra.mxu0 0
  %844 = vmatprep.subr.bf16.mxu0 0
  %845 = vmatpush2.bf16.msra.mxu0 0
  %846 = vmatprep.subr.bf16.mxu0 0
  %847 = vmatpush2.bf16.msra.mxu0 0
  %848 = vmatprep.subr.bf16.mxu0 0
  %849 = vmatpush2.bf16.msra.mxu0 0
  %850 = vmatprep.subr.bf16.mxu0 0
  %851 = vmatpush2.bf16.msra.mxu0 0
  %852 = vmatprep.subr.bf16.mxu0 0
  %853 = vmatpush2.bf16.msra.mxu0 0
  %854 = vmatprep.subr.bf16.mxu0 0
  %855 = vmatpush2.bf16.msra.mxu0 0
  %856 = vmatprep.subr.bf16.mxu0 0
  %857 = vmatpush2.bf16.msra.mxu0 0
  %858 = vmatprep.mubr.bf16.mxu0 0
  %859 = vmatmul.mubr.bf16.gmra.mxu0 %v726
  %v860 = vpop.f32.mrf.mxu0
  %v861 = vadd.f32 0.0, %v860
  %v862 = vpop.f32.mrf.mxu0
  %v863 = vpop.f32.mrf.mxu0
  %v864 = vadd.f32 0.0, %v863
  %v865 = vpop.f32.mrf.mxu0
  %866 = vmatprep.mubr.bf16.mxu0 0
  %867 = vmatmul.mubr.bf16.gmra.mxu0 %v727
  %v868 = vpop.f32.mrf.mxu0
  %v869 = vadd.f32 0.0, %v868
  %v870 = vpop.f32.mrf.mxu0
  %v871 = vpop.f32.mrf.mxu0
  %v872 = vadd.f32 0.0, %v871
  %v873 = vpop.f32.mrf.mxu0
  %874 = vmatprep.mubr.bf16.mxu0 0
  %875 = vmatmul.mubr.bf16.gmra.mxu0 %v728
  %v876 = vpop.f32.mrf.mxu0
  %v877 = vadd.f32 0.0, %v876
  %v878 = vpop.f32.mrf.mxu0
  %v879 = vpop.f32.mrf.mxu0
  %v880 = vpop.f32.mrf.mxu0
  %881 = vdwg.mxu0
  %v898 = vunpack.c.l.b16 %v745
  %v899 = vunpack.c.l.b16 %v746
  %v900 = vunpack.c.l.b16 %v747
  %v901 = vunpack.c.l.b16 %v748
  %v902 = vunpack.c.l.b16 %v749
  %v903 = vunpack.c.l.b16 %v750
  %v904 = vunpack.c.l.b16 %v751
  %v905 = vunpack.c.l.b16 %v752
  %v906 = vunpack.c.l.b16 %v753
  %v907 = vunpack.c.l.b16 %v754
  %v908 = vunpack.c.l.b16 %v755
  %v909 = vunpack.c.l.b16 %v756
  %v910 = vunpack.c.l.b16 %v757
  %v911 = vunpack.c.l.b16 %v758
  %v912 = vunpack.c.l.b16 %v759
  %v913 = vunpack.c.l.b16 %v760
  %v914 = vpack.c.b16 %v899, %v898
  %v915 = vpack.c.b16 %v901, %v900
  %v916 = vpack.c.b16 %v903, %v902
  %v917 = vpack.c.b16 %v905, %v904
  %v918 = vpack.c.b16 %v907, %v906
  %v919 = vpack.c.b16 %v909, %v908
  %v920 = vpack.c.b16 %v911, %v910
  %v921 = vpack.c.b16 %v913, %v912
  %930 = vmatprep.subr.bf16.mxu0 0
  %931 = vmatpush1.bf16.msra.mxu0 %v921
  %932 = vmatprep.subr.bf16.mxu0 0
  %933 = vmatpush1.bf16.msra.mxu0 %v920
  %934 = vmatprep.subr.bf16.mxu0 0
  %935 = vmatpush1.bf16.msra.mxu0 %v919
  %936 = vmatprep.subr.bf16.mxu0 0
  %937 = vmatpush1.bf16.msra.mxu0 %v918
  %938 = vmatprep.subr.bf16.mxu0 0
  %939 = vmatpush1.bf16.msra.mxu0 %v917
  %940 = vmatprep.subr.bf16.mxu0 0
  %941 = vmatpush1.bf16.msra.mxu0 %v916
  %942 = vmatprep.subr.bf16.mxu0 0
  %943 = vmatpush1.bf16.msra.mxu0 %v915
  %944 = vmatprep.subr.bf16.mxu0 0
  %945 = vmatpush1.bf16.msra.mxu0 %v914
  %946 = vmatprep.subr.bf16.mxu0 0
  %947 = vmatpush2.bf16.msra.mxu0 0
  %948 = vmatprep.subr.bf16.mxu0 0
  %949 = vmatpush2.bf16.msra.mxu0 0
  %950 = vmatprep.subr.bf16.mxu0 0
  %951 = vmatpush2.bf16.msra.mxu0 0
  %952 = vmatprep.subr.bf16.mxu0 0
  %953 = vmatpush2.bf16.msra.mxu0 0
  %954 = vmatprep.subr.bf16.mxu0 0
  %955 = vmatpush2.bf16.msra.mxu0 0
  %956 = vmatprep.subr.bf16.mxu0 0
  %957 = vmatpush2.bf16.msra.mxu0 0
  %958 = vmatprep.subr.bf16.mxu0 0
  %959 = vmatpush2.bf16.msra.mxu0 0
  %960 = vmatprep.subr.bf16.mxu0 0
  %961 = vmatpush2.bf16.msra.mxu0 0
  %962 = vmatprep.mubr.bf16.mxu0 0
  %963 = vmatmul.mubr.bf16.gmra.mxu0 %v734
  %v964 = vpop.f32.mrf.mxu0
  %v965 = vadd.f32 %v861, %v964
  %v966 = vpop.f32.mrf.mxu0
  %v967 = vpop.f32.mrf.mxu0
  %v968 = vadd.f32 %v864, %v967
  %v969 = vpop.f32.mrf.mxu0
  %970 = vmatprep.mubr.bf16.mxu0 0
  %971 = vmatmul.mubr.bf16.gmra.mxu0 %v735
  %v972 = vpop.f32.mrf.mxu0
  %v973 = vadd.f32 %v869, %v972
  %v974 = vpop.f32.mrf.mxu0
  %v975 = vpop.f32.mrf.mxu0
  %v976 = vadd.f32 %v872, %v975
  %v977 = vpop.f32.mrf.mxu0
  %978 = vmatprep.mubr.bf16.mxu0 0
  %979 = vmatmul.mubr.bf16.gmra.mxu0 %v736
  %v980 = vpop.f32.mrf.mxu0
  %v981 = vadd.f32 %v877, %v980
  %v982 = vpop.f32.mrf.mxu0
  %v983 = vpop.f32.mrf.mxu0
  %v984 = vpop.f32.mrf.mxu0
  %985 = vdwg.mxu0
  %s986 = scalar_lea.vmem %s2, 128
  %v987 = vld [vmem:[%s986] sm:$0xf]
  %v988 = vld [vmem:[%s986 + $0x4] sm:$0xf]
  %v989 = vld [vmem:[%s986 + $0x8] sm:$0xf]
  %v990 = vld [vmem:[%s986 + $0xc] sm:$0xf]
  %v991 = vld [vmem:[%s986 + $0x10] sm:$0xf]
  %v992 = vld [vmem:[%s986 + $0x14] sm:$0xf]
  %v993 = vld [vmem:[%s986 + $0x18] sm:$0xf]
  %v994 = vld [vmem:[%s986 + $0x1c] sm:$0xf]
  %v995 = vld [vmem:[%s986 + $0x20] sm:$0xf]
  %v996 = vld [vmem:[%s986 + $0x24] sm:$0xf]
  %v997 = vld [vmem:[%s986 + $0x28] sm:$0xf]
  %v998 = vld [vmem:[%s986 + $0x2c] sm:$0xf]
  %v999 = vld [vmem:[%s986 + $0x30] sm:$0xf]
  %v1000 = vld [vmem:[%s986 + $0x34] sm:$0xf]
  %v1001 = vld [vmem:[%s986 + $0x38] sm:$0xf]
  %v1002 = vld [vmem:[%s986 + $0x3c] sm:$0xf]
  %v1019 = vunpack.c.l.b16 %v987
  %v1020 = vunpack.c.l.b16 %v988
  %v1021 = vunpack.c.l.b16 %v989
  %v1022 = vunpack.c.l.b16 %v990
  %v1023 = vunpack.c.l.b16 %v991
  %v1024 = vunpack.c.l.b16 %v992
  %v1025 = vunpack.c.l.b16 %v993
  %v1026 = vunpack.c.l.b16 %v994
  %v1027 = vunpack.c.l.b16 %v995
  %v1028 = vunpack.c.l.b16 %v996
  %v1029 = vunpack.c.l.b16 %v997
  %v1030 = vunpack.c.l.b16 %v998
  %v1031 = vunpack.c.l.b16 %v999
  %v1032 = vunpack.c.l.b16 %v1000
  %v1033 = vunpack.c.l.b16 %v1001
  %v1034 = vunpack.c.l.b16 %v1002
  %v1035 = vpack.c.b16 %v1020, %v1019
  %v1036 = vpack.c.b16 %v1022, %v1021
  %v1037 = vpack.c.b16 %v1024, %v1023
  %v1038 = vpack.c.b16 %v1026, %v1025
  %v1039 = vpack.c.b16 %v1028, %v1027
  %v1040 = vpack.c.b16 %v1030, %v1029
  %v1041 = vpack.c.b16 %v1032, %v1031
  %v1042 = vpack.c.b16 %v1034, %v1033
  %1051 = vmatprep.subr.bf16.mxu0 0
  %1052 = vmatpush1.bf16.msra.mxu0 %v1042
  %1053 = vmatprep.subr.bf16.mxu0 0
  %1054 = vmatpush1.bf16.msra.mxu0 %v1041
  %1055 = vmatprep.subr.bf16.mxu0 0
  %1056 = vmatpush1.bf16.msra.mxu0 %v1040
  %1057 = vmatprep.subr.bf16.mxu0 0
  %1058 = vmatpush1.bf16.msra.mxu0 %v1039
  %1059 = vmatprep.subr.bf16.mxu0 0
  %1060 = vmatpush1.bf16.msra.mxu0 %v1038
  %1061 = vmatprep.subr.bf16.mxu0 0
  %1062 = vmatpush1.bf16.msra.mxu0 %v1037
  %1063 = vmatprep.subr.bf16.mxu0 0
  %1064 = vmatpush1.bf16.msra.mxu0 %v1036
  %1065 = vmatprep.subr.bf16.mxu0 0
  %1066 = vmatpush1.bf16.msra.mxu0 %v1035
  %1067 = vmatprep.subr.bf16.mxu0 0
  %1068 = vmatpush2.bf16.msra.mxu0 0
  %1069 = vmatprep.subr.bf16.mxu0 0
  %1070 = vmatpush2.bf16.msra.mxu0 0
  %1071 = vmatprep.subr.bf16.mxu0 0
  %1072 = vmatpush2.bf16.msra.mxu0 0
  %1073 = vmatprep.subr.bf16.mxu0 0
  %1074 = vmatpush2.bf16.msra.mxu0 0
  %1075 = vmatprep.subr.bf16.mxu0 0
  %1076 = vmatpush2.bf16.msra.mxu0 0
  %1077 = vmatprep.subr.bf16.mxu0 0
  %1078 = vmatpush2.bf16.msra.mxu0 0
  %1079 = vmatprep.subr.bf16.mxu0 0
  %1080 = vmatpush2.bf16.msra.mxu0 0
  %1081 = vmatprep.subr.bf16.mxu0 0
  %1082 = vmatpush2.bf16.msra.mxu0 0
  %1083 = vmatprep.mubr.bf16.mxu0 0
  %1084 = vmatmul.mubr.bf16.gmra.mxu0 %v742
  %v1085 = vpop.f32.mrf.mxu0
  %v1086 = vadd.f32 0.0, %v1085
  %v1087 = vpop.f32.mrf.mxu0
  %v1088 = vpop.f32.mrf.mxu0
  %v1089 = vadd.f32 0.0, %v1088
  %v1090 = vpop.f32.mrf.mxu0
  %1091 = vmatprep.mubr.bf16.mxu0 0
  %1092 = vmatmul.mubr.bf16.gmra.mxu0 %v743
  %v1093 = vpop.f32.mrf.mxu0
  %v1094 = vadd.f32 0.0, %v1093
  %v1095 = vpop.f32.mrf.mxu0
  %v1096 = vpop.f32.mrf.mxu0
  %v1097 = vadd.f32 0.0, %v1096
  %v1098 = vpop.f32.mrf.mxu0
  %1099 = vmatprep.mubr.bf16.mxu0 0
  %1100 = vmatmul.mubr.bf16.gmra.mxu0 %v744
  %v1101 = vpop.f32.mrf.mxu0
  %v1102 = vadd.f32 0.0, %v1101
  %v1103 = vpop.f32.mrf.mxu0
  %v1104 = vpop.f32.mrf.mxu0
  %v1105 = vpop.f32.mrf.mxu0
  %1106 = vdwg.mxu0
  %v1107 = vadd.f32 %v965, %v1086
  %v1108 = vadd.f32 %v968, %v1089
  %v1109 = vadd.f32 %v973, %v1094
  %v1110 = vadd.f32 %v976, %v1097
  %v1111 = vadd.f32 %v981, %v1102
  %v1112 = vmul.f32 %v1107, %v435
  %v1113 = vmul.f32 %v1108, %v440
  %v1114 = vmul.f32 %v1109, %v445
  %v1115 = vmul.f32 %v1110, %v450
  %v1116 = vmul.f32 %v1111, %v455
  %v1117 = vadd.f32 %v1112, %v1113
  %v1118 = vadd.f32 %v1117, %v1114
  %v1119 = vadd.f32 %v1118, %v1115
  %v1120 = vsel %vm465, %v1116, 0.0
  %v1121 = vadd.f32 %v1119, %v1120
  %v1122 = vrot.slane %v1121, 4
  %v1123 = vadd.f32 %v1121, %v1122
  %v1124 = vrot.slane %v1123, 2
  %v1125 = vadd.f32 %v1123, %v1124
  %v1126 = vrot.slane %v1125, 1
  %v1127 = vadd.f32 %v1125, %v1126
  %v1128 = vmul.f32 %v1112, %v1107
  %v1129 = vmul.f32 %v1113, %v1108
  %v1130 = vmul.f32 %v1114, %v1109
  %v1131 = vmul.f32 %v1115, %v1110
  %v1132 = vmul.f32 %v1116, %v1111
  %v1133 = vadd.f32 %v1128, %v1129
  %v1134 = vadd.f32 %v1133, %v1130
  %v1135 = vadd.f32 %v1134, %v1131
  %v1136 = vsel %vm465, %v1132, 0.0
  %v1137 = vadd.f32 %v1135, %v1136
  %v1138 = vrot.slane %v1137, 4
  %v1139 = vadd.f32 %v1137, %v1138
  %v1140 = vrot.slane %v1139, 2
  %v1141 = vadd.f32 %v1139, %v1140
  %v1142 = vrot.slane %v1141, 1
  %v1143 = vadd.f32 %v1141, %v1142
  %v1144 = vsel %vm490, %v1127, %v1143
  %v1145 = vld [vmem:[%s3] sm:$0xff]
  %v1146 = vld [vmem:[%s3 + $0x8] sm:$0xff]
  %v1147 = vld [vmem:[%s3 + $0x10] sm:$0xff]
  %v1148 = vld [vmem:[%s3 + $0x18] sm:$0xff]
  %v1149 = vld [vmem:[%s3 + $0x20] sm:$0xff]
  %v1150 = vld [vmem:[%s3 + $0x28] sm:$0xff]
  %v1151 = vld [vmem:[%s3 + $0x30] sm:$0xff]
  %v1152 = vld [vmem:[%s3 + $0x38] sm:$0xff]
  %v1153 = vld [vmem:[%s3 + $0x40] sm:$0xff]
  %v1154 = vld [vmem:[%s3 + $0x48] sm:$0xff]
  %v1155 = vld [vmem:[%s3 + $0x50] sm:$0xff]
  %v1156 = vld [vmem:[%s3 + $0x58] sm:$0xff]
  %v1157 = vld [vmem:[%s3 + $0x60] sm:$0xff]
  %v1158 = vld [vmem:[%s3 + $0x68] sm:$0xff]
  %v1159 = vld [vmem:[%s3 + $0x70] sm:$0xff]
  %v1160 = vld [vmem:[%s3 + $0x78] sm:$0xff]
  %1161 = vmatprep.subr.mxu0 0.0
  %1162 = vmatpush1.msra.mxu0 %v1160
  %1163 = vmatprep.subr.mxu0 0.0
  %1164 = vmatpush1.msra.mxu0 %v1159
  %1165 = vmatprep.subr.mxu0 0.0
  %1166 = vmatpush1.msra.mxu0 %v1158
  %1167 = vmatprep.subr.mxu0 0.0
  %1168 = vmatpush1.msra.mxu0 %v1157
  %1169 = vmatprep.subr.mxu0 0.0
  %1170 = vmatpush1.msra.mxu0 %v1156
  %1171 = vmatprep.subr.mxu0 0.0
  %1172 = vmatpush1.msra.mxu0 %v1155
  %1173 = vmatprep.subr.mxu0 0.0
  %1174 = vmatpush1.msra.mxu0 %v1154
  %1175 = vmatprep.subr.mxu0 0.0
  %1176 = vmatpush1.msra.mxu0 %v1153
  %1177 = vmatprep.subr.mxu0 0.0
  %1178 = vmatpush1.msra.mxu0 %v1152
  %1179 = vmatprep.subr.mxu0 0.0
  %1180 = vmatpush1.msra.mxu0 %v1151
  %1181 = vmatprep.subr.mxu0 0.0
  %1182 = vmatpush1.msra.mxu0 %v1150
  %1183 = vmatprep.subr.mxu0 0.0
  %1184 = vmatpush1.msra.mxu0 %v1149
  %1185 = vmatprep.subr.mxu0 0.0
  %1186 = vmatpush1.msra.mxu0 %v1148
  %1187 = vmatprep.subr.mxu0 0.0
  %1188 = vmatpush1.msra.mxu0 %v1147
  %1189 = vmatprep.subr.mxu0 0.0
  %1190 = vmatpush1.msra.mxu0 %v1146
  %1191 = vmatprep.subr.mxu0 0.0
  %1192 = vmatpush1.msra.mxu0 %v1145
  %1193 = vmatprep.subr.mxu0 0.0
  %1194 = vmatpush2.msra.mxu0 0.0
  %1195 = vmatprep.subr.mxu0 0.0
  %1196 = vmatpush2.msra.mxu0 0.0
  %1197 = vmatprep.subr.mxu0 0.0
  %1198 = vmatpush2.msra.mxu0 0.0
  %1199 = vmatprep.subr.mxu0 0.0
  %1200 = vmatpush2.msra.mxu0 0.0
  %1201 = vmatprep.subr.mxu0 0.0
  %1202 = vmatpush2.msra.mxu0 0.0
  %1203 = vmatprep.subr.mxu0 0.0
  %1204 = vmatpush2.msra.mxu0 0.0
  %1205 = vmatprep.subr.mxu0 0.0
  %1206 = vmatpush2.msra.mxu0 0.0
  %1207 = vmatprep.subr.mxu0 0.0
  %1208 = vmatpush2.msra.mxu0 0.0
  %1209 = vmatprep.subr.mxu0 0.0
  %1210 = vmatpush2.msra.mxu0 0.0
  %1211 = vmatprep.subr.mxu0 0.0
  %1212 = vmatpush2.msra.mxu0 0.0
  %1213 = vmatprep.subr.mxu0 0.0
  %1214 = vmatpush2.msra.mxu0 0.0
  %1215 = vmatprep.subr.mxu0 0.0
  %1216 = vmatpush2.msra.mxu0 0.0
  %1217 = vmatprep.subr.mxu0 0.0
  %1218 = vmatpush2.msra.mxu0 0.0
  %1219 = vmatprep.subr.mxu0 0.0
  %1220 = vmatpush2.msra.mxu0 0.0
  %1221 = vmatprep.subr.mxu0 0.0
  %1222 = vmatpush2.msra.mxu0 0.0
  %1223 = vmatprep.subr.mxu0 0.0
  %1224 = vmatpush2.msra.mxu0 0.0
  %1225 = vmatprep.mubr.f32.mxu0 0.0
  %1226 = vmatmul.mubr.f32.gmra.mxu0 %v1144
  %v1227 = vpop.f32.mrf.mxu0
  %v1228 = vadd.f32 0.0, %v1227
  %v1229 = vpop.f32.mrf.mxu0
  %1230 = vdwg.mxu0
  %v1231 = vmul.f32 %v1228, 0.001953125
  %v1232 = vmul.f32 %v1231, %v1231
  %v1234 = vrot.slane %v1232, 7
  %v1236 = vsub.f32 %v1231, %v1234
  %v1237 = vmax.f32 %v1236, 0.0
  %v1238 = vld [vmem:[%s8] sm:$0x1]
  %v1239 = vadd.f32 %v1237, 1e-05
  %v1240 = vrsqrt.pop %v1239
  %v1243 = vunpack.c.l.s4 1966171168
  %v1244 = vunpack.c.0.s8 %v1243
  %v1245 = vlaneseq
  %v1246 = vshrl.u32 %v1245, 7
  %v1247 = vsub.s32 %v1244, %v1246
  %v1248 = vrot.slane %v1240, %v1247
  %v1249 = vcombine.high %v1248, %v1248
  %v1251 = vunpack.c.l.s4 1966171168
  %v1252 = vunpack.c.0.s8 %v1251
  %v1253 = vlaneseq
  %v1254 = vshrl.u32 %v1253, 7
  %v1255 = vsub.s32 %v1252, %v1254
  %v1256 = vrot.slane %v1249, %v1255
  %v1258 = vmul.f32 %v1238, %v1256
  %v1259 = vld [vmem:[%s9] sm:$0x1]
  %v1260 = vmul.f32 %v1231, %v1258
  %v1261 = vsub.f32 %v1259, %v1260
  %v1263 = vlaneseq
  %v1264 = vshrl.u32 %v1263, 7
  %v1265 = vsub.s32 0, %v1264
  %v1266 = vrot.slane %v1261, %v1265
  %v1268 = vsel %vm490, %v1258, %v1266
  %v1269 = vld [vmem:[%s4] sm:$0xff]
  %v1271 = vsel %vm617, %v1268, 0
  %1273 = vmatprep.subr.mxu0 0.0
  %1274 = vmatpush1.msra.mxu0 0.0
  %1275 = vmatprep.subr.mxu0 0.0
  %1276 = vmatpush1.msra.mxu0 0.0
  %1277 = vmatprep.subr.mxu0 0.0
  %1278 = vmatpush1.msra.mxu0 0.0
  %1279 = vmatprep.subr.mxu0 0.0
  %1280 = vmatpush1.msra.mxu0 0.0
  %1281 = vmatprep.subr.mxu0 0.0
  %1282 = vmatpush1.msra.mxu0 0.0
  %1283 = vmatprep.subr.mxu0 0.0
  %1284 = vmatpush1.msra.mxu0 0.0
  %1285 = vmatprep.subr.mxu0 0.0
  %1286 = vmatpush1.msra.mxu0 0.0
  %1287 = vmatprep.subr.mxu0 0.0
  %1288 = vmatpush1.msra.mxu0 0.0
  %1289 = vmatprep.subr.mxu0 0.0
  %1290 = vmatpush1.msra.mxu0 0.0
  %1291 = vmatprep.subr.mxu0 0.0
  %1292 = vmatpush1.msra.mxu0 0.0
  %1293 = vmatprep.subr.mxu0 0.0
  %1294 = vmatpush1.msra.mxu0 0.0
  %1295 = vmatprep.subr.mxu0 0.0
  %1296 = vmatpush1.msra.mxu0 0.0
  %1297 = vmatprep.subr.mxu0 0.0
  %1298 = vmatpush1.msra.mxu0 0.0
  %1299 = vmatprep.subr.mxu0 0.0
  %1300 = vmatpush1.msra.mxu0 0.0
  %1301 = vmatprep.subr.mxu0 0.0
  %1302 = vmatpush1.msra.mxu0 0.0
  %1303 = vmatprep.subr.mxu0 0.0
  %1304 = vmatpush1.msra.mxu0 %v1269
  %1305 = vmatprep.subr.mxu0 0.0
  %1306 = vmatpush2.msra.mxu0 0.0
  %1307 = vmatprep.subr.mxu0 0.0
  %1308 = vmatpush2.msra.mxu0 0.0
  %1309 = vmatprep.subr.mxu0 0.0
  %1310 = vmatpush2.msra.mxu0 0.0
  %1311 = vmatprep.subr.mxu0 0.0
  %1312 = vmatpush2.msra.mxu0 0.0
  %1313 = vmatprep.subr.mxu0 0.0
  %1314 = vmatpush2.msra.mxu0 0.0
  %1315 = vmatprep.subr.mxu0 0.0
  %1316 = vmatpush2.msra.mxu0 0.0
  %1317 = vmatprep.subr.mxu0 0.0
  %1318 = vmatpush2.msra.mxu0 0.0
  %1319 = vmatprep.subr.mxu0 0.0
  %1320 = vmatpush2.msra.mxu0 0.0
  %1321 = vmatprep.subr.mxu0 0.0
  %1322 = vmatpush2.msra.mxu0 0.0
  %1323 = vmatprep.subr.mxu0 0.0
  %1324 = vmatpush2.msra.mxu0 0.0
  %1325 = vmatprep.subr.mxu0 0.0
  %1326 = vmatpush2.msra.mxu0 0.0
  %1327 = vmatprep.subr.mxu0 0.0
  %1328 = vmatpush2.msra.mxu0 0.0
  %1329 = vmatprep.subr.mxu0 0.0
  %1330 = vmatpush2.msra.mxu0 0.0
  %1331 = vmatprep.subr.mxu0 0.0
  %1332 = vmatpush2.msra.mxu0 0.0
  %1333 = vmatprep.subr.mxu0 0.0
  %1334 = vmatpush2.msra.mxu0 0.0
  %1335 = vmatprep.subr.mxu0 0.0
  %1336 = vmatpush2.msra.mxu0 0.0
  %1337 = vmatprep.mubr.f32.mxu0 0.0
  %1338 = vmatmul.mubr.f32.gmra.mxu0 %v1271
  %v1339 = vpop.f32.mrf.mxu0
  %v1340 = vadd.f32 0.0, %v1339
  %v1341 = vpop.f32.mrf.mxu0
  %1342 = vdwg.mxu0
  %v1343 = vlaneseq
  %v1344 = vshrl.u32 %v1343, 7
  %v1345 = vsub.s32 0, %v1344
  %v1346 = vrot.slane %v1340, %v1345
  %v1347 = vmul.f32 %v1107, %v1346
  %v1348 = vmul.f32 %v1108, %v1346
  %v1349 = vmul.f32 %v1109, %v1346
  %v1350 = vmul.f32 %v1110, %v1346
  %v1351 = vmul.f32 %v1111, %v1346
  %v1352 = vlaneseq
  %v1353 = vshrl.u32 %v1352, 7
  %v1354 = vsub.s32 1, %v1353
  %v1355 = vrot.slane %v1340, %v1354
  %v1356 = vadd.f32 %v1347, %v1355
  %v1357 = vadd.f32 %v1348, %v1355
  %v1358 = vadd.f32 %v1349, %v1355
  %v1359 = vadd.f32 %v1350, %v1355
  %v1360 = vadd.f32 %v1351, %v1355
  %v1361 = vld [vmem:[%s0 + $0x1] sm:$0xff]
  %v1362 = vld [vmem:[%s0 + $0x9] sm:$0xff]
  %v1363 = vld [vmem:[%s0 + $0x11] sm:$0xff]
  %v1364 = vld [vmem:[%s0 + $0x19] sm:$0xff]
  %v1365 = vld [vmem:[%s0 + $0x21] sm:$0x3]
  %v1366 = vadd.f32 %v1356, %v1361
  %v1367 = vadd.f32 %v1357, %v1362
  %v1368 = vadd.f32 %v1358, %v1363
  %v1369 = vadd.f32 %v1359, %v1364
  %v1370 = vadd.f32 %v1360, %v1365
  %v1371 = vmax.f32 %v1366, 0.0
  %v1372 = vmax.f32 %v1367, 0.0
  %v1373 = vmax.f32 %v1368, 0.0
  %v1374 = vmax.f32 %v1369, 0.0
  %v1375 = vmax.f32 %v1370, 0.0
  %1376 = vst [vmem:[%s10] sm:$0x1] 0.0
  %1377 = vst [vmem:[%s10 + $0x23] sm:$0x1] 0.0
  %1378 = vst [vmem:[%s10 + $0x1] sm:$0xff] %v1371
  %1379 = vst [vmem:[%s10 + $0x9] sm:$0xff] %v1372
  %1380 = vst [vmem:[%s10 + $0x11] sm:$0xff] %v1373
  %1381 = vst [vmem:[%s10 + $0x19] sm:$0xff] %v1374
  %1382 = vst [vmem:[%s10 + $0x21] sm:$0x3] %v1375
  // Predicated region
  $region42: #{resblock_pallas.1} parent=0 // pred_check
    _
  $region43: #{resblock_pallas.1} parent=0 // pred_check_branch
    %1384 = sbr.rel (0) target = $region45
  $region44: #{resblock_pallas.1} parent=0 // pred_region
    _
  $region45: #{resblock_pallas.1} parent=0 // pred_fallthru
    _
  // Predicated region
  $region46: #{resblock_pallas.1} parent=0 // pred_check
    _
  $region47: #{resblock_pallas.1} parent=0 // pred_check_branch
    %1386 = sbr.rel (0) target = $region49
  $region48: #{resblock_pallas.1} parent=0 // pred_region
    _
  $region49: #{resblock_pallas.1} parent=0 // pred_fallthru
    _

</llo_original>
